<compile_context>
chip_gen: v7x
topology: tpu7x:2x2x1
jax: 0.10.0
libtpu: 0.0.40
codegen_flags: <defaults>
</compile_context>

<pallas_src>
import functools
import math

import jax
import jax.numpy as jnp
import numpy as np
from jax.experimental import pallas as pl
from jax.experimental.pallas import tpu as pltpu


# ----------------------------- kernel helpers -------------------------------


def _layer_norm(v, gamma, beta, eps=1e-12):
    u = jnp.mean(v, axis=-1, keepdims=True)
    d = v - u
    s = jnp.mean(d * d, axis=-1, keepdims=True)
    return gamma * (d * jax.lax.rsqrt(s + eps)) + beta


def _gelu_exact(v):
    # x * 0.5 * (1 + erf(x / sqrt(2))) -- exact (erf) gelu, same as reference.
    return v * 0.5 * (1.0 + jax.lax.erf(v / math.sqrt(2.0)))


# ----------------------------- kernel ----------------------------------------


def transformer_layer_kernel(
    xq_ref, xkv_ref, mask_ref,
    wq_ref, bq_ref, wk_ref, bk_ref, wv_ref, bv_ref,
    wo_ref, bo_ref, g1_ref, beta1_ref,
    wi_ref, bi_ref, wo2_ref, bo2_ref, g2_ref, beta2_ref,
    out_ref,
    *, num_heads, head_size, ffn_chunk,
):
    f32 = jnp.float32
    bf16 = jnp.bfloat16

    xq = xq_ref[0]          # (tq, H) f32 -- query rows for this grid step
    xkv = xkv_ref[0]        # (S, H)  f32 -- full sequence (keys / values)
    mask = mask_ref[0]      # (1, S)  f32 additive attention mask

    tq, H = xq.shape
    S = xkv.shape[0]
    nh, dh = num_heads, head_size

    xq_b = xq.astype(bf16)
    xkv_b = xkv.astype(bf16)

    # Head-major batched projections: weights are (nh, H, dh), activations are
    # broadcast to (nh, rows, H) once so every matmul is a heads-leading
    # batched einsum (no lane slicing / transposes inside the kernel).
    xq_h = jnp.broadcast_to(xq_b[None], (nh, tq, H))
    xkv_h = jnp.broadcast_to(xkv_b[None], (nh, S, H))

    q = jnp.einsum('hqe,hed->hqd', xq_h, wq_ref[...],
                   preferred_element_type=f32) + bq_ref[...]     # (nh, tq, dh)
    k = jnp.einsum('hke,hed->hkd', xkv_h, wk_ref[...],
                   preferred_element_type=f32) + bk_ref[...]     # (nh, S, dh)
    v = jnp.einsum('hke,hed->hkd', xkv_h, wv_ref[...],
                   preferred_element_type=f32) + bv_ref[...]     # (nh, S, dh)

    scale = 1.0 / math.sqrt(dh)
    scores = jnp.einsum('hqd,hkd->hqk', q.astype(bf16), k.astype(bf16),
                        preferred_element_type=f32) * scale      # (nh, tq, S)
    scores = scores + mask[None]            # (1,1,S) broadcast over (nh,tq,S)
    scores = scores - jnp.max(scores, axis=-1, keepdims=True)
    e = jnp.exp(scores)
    denom = jnp.sum(e, axis=-1, keepdims=True)
    probs = e * pl.reciprocal(denom, approx=True)                # softmax

    ctx = jnp.einsum('hqk,hkd->hqd', probs.astype(bf16), v.astype(bf16),
                     preferred_element_type=f32)                 # (nh, tq, dh)

    # Attention output dense: per-head partial outputs, summed over heads
    # (equivalent to concat-over-heads followed by a (H,H) dense).
    attn = jnp.einsum('hqd,hde->hqe', ctx.astype(bf16), wo_ref[...],
                      preferred_element_type=f32)                # (nh, tq, H)
    attn_out = jnp.sum(attn, axis=0) + bo_ref[...]               # (tq, H)

    h1 = _layer_norm(attn_out + xq, g1_ref[...], beta1_ref[...])
    h1_b = h1.astype(bf16)

    # FFN, chunked over the intermediate dimension so the full (tq, I)
    # intermediate is never live at once.
    I = wi_ref.shape[1]
    n_chunks = I // ffn_chunk
    acc = jnp.zeros((tq, H), f32)
    for c in range(n_chunks):
        lo = c * ffn_chunk
        wi_c = wi_ref[:, lo:lo + ffn_chunk]          # (H, chunk)  bf16
        bi_c = bi_ref[:, lo:lo + ffn_chunk]          # (1, chunk)  f32
        inter = jnp.dot(h1_b, wi_c, preferred_element_type=f32) + bi_c
        inter = _gelu_exact(inter)
        acc = acc + jnp.dot(inter.astype(bf16),
                            wo2_ref[lo:lo + ffn_chunk, :],
                            preferred_element_type=f32)
    out2 = acc + bo2_ref[...]

    out = _layer_norm(out2 + h1, g2_ref[...], beta2_ref[...])
    out_ref[0] = out.astype(out_ref.dtype)


# ----------------------------- wrapper ----------------------------------------


def _pick_seq_tile(S):
    for t in (512, 256, 128):
        if S % t == 0:
            return t
    return S


def _pick_ffn_chunk(I):
    for c in (512, 256, 128):
        if I % c == 0:
            return c
    return I


def transformer_layer(x, attention_mask, params, *, num_heads):
    """x: (B, S, H) f32; attention_mask: (B, 1, S) additive f32."""
    B, S, H = x.shape
    I = params["wi"].shape[1]
    nh = num_heads
    dh = H // nh

    bf16 = jnp.bfloat16

    # Head-major weight layouts, computed once outside the kernel.
    def heads_w(w):            # (H, nh*dh) -> (nh, H, dh)
        return w.reshape(H, nh, dh).transpose(1, 0, 2)

    def heads_b(b):            # (1, nh*dh) -> (nh, 1, dh)
        return b.reshape(1, nh, dh).transpose(1, 0, 2)

    wq3 = heads_w(params["wq"]).astype(bf16)
    wk3 = heads_w(params["wk"]).astype(bf16)
    wv3 = heads_w(params["wv"]).astype(bf16)
    bq3 = heads_b(params["bq"])
    bk3 = heads_b(params["bk"])
    bv3 = heads_b(params["bv"])
    wo3 = params["wo"].reshape(nh, dh, H).astype(bf16)   # (nh, dh, H)
    wi_b = params["wi"].astype(bf16)
    wo2_b = params["wo2"].astype(bf16)

    tq = _pick_seq_tile(S)
    n_q = S // tq
    ffn_chunk = _pick_ffn_chunk(I)

    kernel = functools.partial(
        transformer_layer_kernel,
        num_heads=nh, head_size=dh, ffn_chunk=ffn_chunk)

    def rep(shape):
        return pl.BlockSpec(shape, lambda b, qi: (0,) * len(shape))

    grid_spec = pltpu.PrefetchScalarGridSpec(
        num_scalar_prefetch=0,
        grid=(B, n_q),
        in_specs=[
            pl.BlockSpec((1, tq, H), lambda b, qi: (b, qi, 0)),   # x (query tile)
            pl.BlockSpec((1, S, H), lambda b, qi: (b, 0, 0)),     # x (full, K/V)
            pl.BlockSpec((1, 1, S), lambda b, qi: (b, 0, 0)),     # additive mask
            rep((nh, H, dh)), rep((nh, 1, dh)),                   # wq, bq
            rep((nh, H, dh)), rep((nh, 1, dh)),                   # wk, bk
            rep((nh, H, dh)), rep((nh, 1, dh)),                   # wv, bv
            rep((nh, dh, H)), rep((1, H)),                        # wo, bo
            rep((1, H)), rep((1, H)),                             # ln1 gamma, beta
            rep((H, I)), rep((1, I)),                             # wi, bi
            rep((I, H)), rep((1, H)),                             # wo2, bo2
            rep((1, H)), rep((1, H)),                             # ln2 gamma, beta
        ],
        out_specs=pl.BlockSpec((1, tq, H), lambda b, qi: (b, qi, 0)),
    )

    return pl.pallas_call(
        kernel,
        out_shape=jax.ShapeDtypeStruct((B, S, H), x.dtype),
        grid_spec=grid_spec,
        compiler_params=pltpu.CompilerParams(
            dimension_semantics=("parallel", "parallel"),
            vmem_limit_bytes=48 * 1024 * 1024),
    )(
        x, x, attention_mask,
        wq3, bq3, wk3, bk3, wv3, bv3,
        wo3, params["bo"],
        params["ln1_g"], params["ln1_b"],
        wi_b, params["bi"], wo2_b, params["bo2"],
        params["ln2_g"], params["ln2_b"],
    )


# ----------------------------- reference (pure JAX, f32) ----------------------


def transformer_layer_ref(x, attention_mask, params, *, num_heads):
    B, S, H = x.shape
    dh = H // num_heads

    def ln(v, g, b, eps=1e-12):
        u = jnp.mean(v, axis=-1, keepdims=True)
        s = jnp.mean((v - u) ** 2, axis=-1, keepdims=True)
        return g * ((v - u) / jnp.sqrt(s + eps)) + b

    q = x @ params["wq"] + params["bq"]
    k = x @ params["wk"] + params["bk"]
    v = x @ params["wv"] + params["bv"]
    to_heads = lambda t: t.reshape(B, S, num_heads, dh).transpose(0, 2, 1, 3)
    qh, kh, vh = to_heads(q), to_heads(k), to_heads(v)
    scores = jnp.einsum("bhqd,bhkd->bhqk", qh, kh) / math.sqrt(dh)
    scores = scores + attention_mask[:, None, :, :]     # (B,1,1,S) broadcast
    probs = jax.nn.softmax(scores, axis=-1)
    ctx = jnp.einsum("bhqk,bhkd->bhqd", probs, vh)
    ctx = ctx.transpose(0, 2, 1, 3).reshape(B, S, H)
    attn_out = ctx @ params["wo"] + params["bo"]
    h1 = ln(attn_out + x, params["ln1_g"], params["ln1_b"])
    inter = h1 @ params["wi"] + params["bi"]
    inter = inter * 0.5 * (1.0 + jax.lax.erf(inter / math.sqrt(2.0)))
    out2 = inter @ params["wo2"] + params["bo2"]
    return ln(out2 + h1, params["ln2_g"], params["ln2_b"])


# ----------------------------- main -------------------------------------------


if __name__ == "__main__":
    B, S, H, NH = 2, 8, 32, 4
    I = 4 * H  # intermediate_size = 128

    key = jax.random.PRNGKey(0)
    keys = jax.random.split(key, 16)

    def w(k, shape, scale=0.05):
        return (scale * jax.random.normal(k, shape)).astype(jnp.float32)

    params = {
        "wq": w(keys[0], (H, H)), "bq": w(keys[1], (1, H)),
        "wk": w(keys[2], (H, H)), "bk": w(keys[3], (1, H)),
        "wv": w(keys[4], (H, H)), "bv": w(keys[5], (1, H)),
        "wo": w(keys[6], (H, H)), "bo": w(keys[7], (1, H)),
        "ln1_g": jnp.ones((1, H), jnp.float32),
        "ln1_b": jnp.zeros((1, H), jnp.float32),
        "wi": w(keys[8], (H, I)), "bi": w(keys[9], (1, I)),
        "wo2": w(keys[10], (I, H)), "bo2": w(keys[11], (1, H)),
        "ln2_g": jnp.ones((1, H), jnp.float32),
        "ln2_b": jnp.zeros((1, H), jnp.float32),
    }

    x = jax.random.normal(keys[12], (B, S, H), dtype=jnp.float32)
    # Additive attention mask (BERT style): 0 for attend, -10000 for masked.
    valid = jnp.array([[1] * S, [1] * (S - 2) + [0, 0]], dtype=jnp.float32)
    attention_mask = ((1.0 - valid) * -10000.0)[:, None, :]   # (B, 1, S)

    out = transformer_layer(x, attention_mask, params, num_heads=NH)
    out = jax.block_until_ready(out)

    ref = transformer_layer_ref(x, attention_mask, params, num_heads=NH)
    # bf16 matmul inputs (f32 accumulation) vs. pure-f32 reference: loosened
    # tolerance per review guidance.
    np.testing.assert_allclose(np.asarray(out), np.asarray(ref),
                               rtol=2e-2, atol=2e-2)
    print("KERNEL_OK")
</pallas_src>

<mosaic_0001>
module attributes {stable_mosaic.version = 11 : i64} {
  func.func @transformer_layer_kernel(%arg0: i32, %arg1: i32, %arg2: memref<1x8x32xf32, #tpu.memory_space<vmem>>, %arg3: memref<1x8x32xf32, #tpu.memory_space<vmem>>, %arg4: memref<1x1x8xf32, #tpu.memory_space<vmem>>, %arg5: memref<4x32x8xbf16, #tpu.memory_space<vmem>>, %arg6: memref<4x1x8xf32, #tpu.memory_space<vmem>>, %arg7: memref<4x32x8xbf16, #tpu.memory_space<vmem>>, %arg8: memref<4x1x8xf32, #tpu.memory_space<vmem>>, %arg9: memref<4x32x8xbf16, #tpu.memory_space<vmem>>, %arg10: memref<4x1x8xf32, #tpu.memory_space<vmem>>, %arg11: memref<4x8x32xbf16, #tpu.memory_space<vmem>>, %arg12: memref<1x32xf32, #tpu.memory_space<vmem>>, %arg13: memref<1x32xf32, #tpu.memory_space<vmem>>, %arg14: memref<1x32xf32, #tpu.memory_space<vmem>>, %arg15: memref<32x128xbf16, #tpu.memory_space<vmem>>, %arg16: memref<1x128xf32, #tpu.memory_space<vmem>>, %arg17: memref<128x32xbf16, #tpu.memory_space<vmem>>, %arg18: memref<1x32xf32, #tpu.memory_space<vmem>>, %arg19: memref<1x32xf32, #tpu.memory_space<vmem>>, %arg20: memref<1x32xf32, #tpu.memory_space<vmem>>, %arg21: memref<1x8x32xf32, #tpu.memory_space<vmem>>) attributes {dimension_semantics = [#tpu.dimension_semantics<parallel>, #tpu.dimension_semantics<parallel>], iteration_bounds = array<i64: 2, 1>, scalar_prefetch = 0 : i64, scratch_operands = 0 : i64, tpu.core_type = #tpu.core_type<tc>, window_params = [{transform_indices = @transform_0, window_bounds = array<i64: 1, 8, 32>}, {transform_indices = @transform_1, window_bounds = array<i64: 1, 8, 32>}, {transform_indices = @transform_2, window_bounds = array<i64: 1, 1, 8>}, {pipeline_mode = #tpu.pipeline_mode<synchronous>, transform_indices = @transform_3, window_bounds = array<i64: 4, 32, 8>}, {pipeline_mode = #tpu.pipeline_mode<synchronous>, transform_indices = @transform_4, window_bounds = array<i64: 4, 1, 8>}, {pipeline_mode = #tpu.pipeline_mode<synchronous>, transform_indices = @transform_5, window_bounds = array<i64: 4, 32, 8>}, {pipeline_mode = #tpu.pipeline_mode<synchronous>, transform_indices = @transform_6, window_bounds = array<i64: 4, 1, 8>}, {pipeline_mode = #tpu.pipeline_mode<synchronous>, transform_indices = @transform_7, window_bounds = array<i64: 4, 32, 8>}, {pipeline_mode = #tpu.pipeline_mode<synchronous>, transform_indices = @transform_8, window_bounds = array<i64: 4, 1, 8>}, {pipeline_mode = #tpu.pipeline_mode<synchronous>, transform_indices = @transform_9, window_bounds = array<i64: 4, 8, 32>}, {pipeline_mode = #tpu.pipeline_mode<synchronous>, transform_indices = @transform_10, window_bounds = array<i64: 1, 32>}, {pipeline_mode = #tpu.pipeline_mode<synchronous>, transform_indices = @transform_11, window_bounds = array<i64: 1, 32>}, {pipeline_mode = #tpu.pipeline_mode<synchronous>, transform_indices = @transform_12, window_bounds = array<i64: 1, 32>}, {pipeline_mode = #tpu.pipeline_mode<synchronous>, transform_indices = @transform_13, window_bounds = array<i64: 32, 128>}, {pipeline_mode = #tpu.pipeline_mode<synchronous>, transform_indices = @transform_14, window_bounds = array<i64: 1, 128>}, {pipeline_mode = #tpu.pipeline_mode<synchronous>, transform_indices = @transform_15, window_bounds = array<i64: 128, 32>}, {pipeline_mode = #tpu.pipeline_mode<synchronous>, transform_indices = @transform_16, window_bounds = array<i64: 1, 32>}, {pipeline_mode = #tpu.pipeline_mode<synchronous>, transform_indices = @transform_17, window_bounds = array<i64: 1, 32>}, {pipeline_mode = #tpu.pipeline_mode<synchronous>, transform_indices = @transform_18, window_bounds = array<i64: 1, 32>}, {transform_indices = @transform_19, window_bounds = array<i64: 1, 8, 32>}]} {
    %c0 = arith.constant 0 : index
    %c0_0 = arith.constant 0 : index
    %c0_1 = arith.constant 0 : index
    %0 = vector.load %arg2[%c0, %c0_0, %c0_1] : memref<1x8x32xf32, #tpu.memory_space<vmem>>, vector<1x8x32xf32>
    %1 = vector.shape_cast %0 : vector<1x8x32xf32> to vector<8x32xf32>
    %c0_2 = arith.constant 0 : index
    %c0_3 = arith.constant 0 : index
    %c0_4 = arith.constant 0 : index
    %2 = vector.load %arg3[%c0_2, %c0_3, %c0_4] : memref<1x8x32xf32, #tpu.memory_space<vmem>>, vector<1x8x32xf32>
    %3 = vector.shape_cast %2 : vector<1x8x32xf32> to vector<8x32xf32>
    %c0_5 = arith.constant 0 : index
    %c0_6 = arith.constant 0 : index
    %c0_7 = arith.constant 0 : index
    %4 = vector.load %arg4[%c0_5, %c0_6, %c0_7] : memref<1x1x8xf32, #tpu.memory_space<vmem>>, vector<1x1x8xf32>
    %5 = vector.shape_cast %4 : vector<1x1x8xf32> to vector<1x8xf32>
    %6 = arith.truncf %1 : vector<8x32xf32> to vector<8x32xbf16>
    %7 = arith.truncf %3 : vector<8x32xf32> to vector<8x32xbf16>
    %8 = vector.shape_cast %6 : vector<8x32xbf16> to vector<1x8x32xbf16>
    %9 = vector.shape_cast %8 : vector<1x8x32xbf16> to vector<1x8x32xbf16>
    %10 = vector.broadcast %9 : vector<1x8x32xbf16> to vector<4x8x32xbf16>
    %11 = vector.shape_cast %7 : vector<8x32xbf16> to vector<1x8x32xbf16>
    %12 = vector.shape_cast %11 : vector<1x8x32xbf16> to vector<1x8x32xbf16>
    %13 = vector.broadcast %12 : vector<1x8x32xbf16> to vector<4x8x32xbf16>
    %c0_8 = arith.constant 0 : index
    %c0_9 = arith.constant 0 : index
    %c0_10 = arith.constant 0 : index
    %14 = vector.load %arg5[%c0_8, %c0_9, %c0_10] : memref<4x32x8xbf16, #tpu.memory_space<vmem>>, vector<4x32x8xbf16>
    "tpu.trace_start"() <{level = 10 : i32, message = "hqe,hed->hqd"}> : () -> ()
    %cst = arith.constant dense<0.000000e+00> : vector<4x8x8xf32>
    %15 = tpu.matmul %10, %14, %cst {dimension_numbers = #tpu.dot_dimension_numbers<[2], [1], [1], [2], [0, 0, 0, 1, 1, 2], [0], [0]>} : vector<4x8x32xbf16>, vector<4x32x8xbf16>, vector<4x8x8xf32> -> vector<4x8x8xf32>
    "tpu.trace_stop"() : () -> ()
    %c0_11 = arith.constant 0 : index
    %c0_12 = arith.constant 0 : index
    %c0_13 = arith.constant 0 : index
    %16 = vector.load %arg6[%c0_11, %c0_12, %c0_13] : memref<4x1x8xf32, #tpu.memory_space<vmem>>, vector<4x1x8xf32>
    %17 = vector.broadcast %16 : vector<4x1x8xf32> to vector<4x8x8xf32>
    %18 = arith.addf %15, %17 : vector<4x8x8xf32>
    %c0_14 = arith.constant 0 : index
    %c0_15 = arith.constant 0 : index
    %c0_16 = arith.constant 0 : index
    %19 = vector.load %arg7[%c0_14, %c0_15, %c0_16] : memref<4x32x8xbf16, #tpu.memory_space<vmem>>, vector<4x32x8xbf16>
    "tpu.trace_start"() <{level = 10 : i32, message = "hke,hed->hkd"}> : () -> ()
    %cst_17 = arith.constant dense<0.000000e+00> : vector<4x8x8xf32>
    %20 = tpu.matmul %13, %19, %cst_17 {dimension_numbers = #tpu.dot_dimension_numbers<[2], [1], [1], [2], [0, 0, 0, 1, 1, 2], [0], [0]>} : vector<4x8x32xbf16>, vector<4x32x8xbf16>, vector<4x8x8xf32> -> vector<4x8x8xf32>
    "tpu.trace_stop"() : () -> ()
    %c0_18 = arith.constant 0 : index
    %c0_19 = arith.constant 0 : index
    %c0_20 = arith.constant 0 : index
    %21 = vector.load %arg8[%c0_18, %c0_19, %c0_20] : memref<4x1x8xf32, #tpu.memory_space<vmem>>, vector<4x1x8xf32>
    %22 = vector.broadcast %21 : vector<4x1x8xf32> to vector<4x8x8xf32>
    %23 = arith.addf %20, %22 : vector<4x8x8xf32>
    %c0_21 = arith.constant 0 : index
    %c0_22 = arith.constant 0 : index
    %c0_23 = arith.constant 0 : index
    %24 = vector.load %arg9[%c0_21, %c0_22, %c0_23] : memref<4x32x8xbf16, #tpu.memory_space<vmem>>, vector<4x32x8xbf16>
    "tpu.trace_start"() <{level = 10 : i32, message = "hke,hed->hkd"}> : () -> ()
    %cst_24 = arith.constant dense<0.000000e+00> : vector<4x8x8xf32>
    %25 = tpu.matmul %13, %24, %cst_24 {dimension_numbers = #tpu.dot_dimension_numbers<[2], [1], [1], [2], [0, 0, 0, 1, 1, 2], [0], [0]>} : vector<4x8x32xbf16>, vector<4x32x8xbf16>, vector<4x8x8xf32> -> vector<4x8x8xf32>
    "tpu.trace_stop"() : () -> ()
    %c0_25 = arith.constant 0 : index
    %c0_26 = arith.constant 0 : index
    %c0_27 = arith.constant 0 : index
    %26 = vector.load %arg10[%c0_25, %c0_26, %c0_27] : memref<4x1x8xf32, #tpu.memory_space<vmem>>, vector<4x1x8xf32>
    %27 = vector.broadcast %26 : vector<4x1x8xf32> to vector<4x8x8xf32>
    %28 = arith.addf %25, %27 : vector<4x8x8xf32>
    %29 = arith.truncf %18 : vector<4x8x8xf32> to vector<4x8x8xbf16>
    %30 = arith.truncf %23 : vector<4x8x8xf32> to vector<4x8x8xbf16>
    "tpu.trace_start"() <{level = 10 : i32, message = "hqd,hkd->hqk"}> : () -> ()
    %cst_28 = arith.constant dense<0.000000e+00> : vector<4x8x8xf32>
    %31 = tpu.matmul %29, %30, %cst_28 {dimension_numbers = #tpu.dot_dimension_numbers<[2], [2], [1], [1], [0, 0, 0, 1, 1, 1], [0], [0]>} : vector<4x8x8xbf16>, vector<4x8x8xbf16>, vector<4x8x8xf32> -> vector<4x8x8xf32>
    "tpu.trace_stop"() : () -> ()
    %cst_29 = arith.constant 0.353553385 : f32
    %32 = vector.broadcast %cst_29 : f32 to vector<4x8x8xf32>
    %33 = arith.mulf %31, %32 : vector<4x8x8xf32>
    %34 = vector.shape_cast %5 : vector<1x8xf32> to vector<1x1x8xf32>
    %35 = vector.broadcast %34 : vector<1x1x8xf32> to vector<4x8x8xf32>
    %36 = arith.addf %33, %35 : vector<4x8x8xf32>
    %cst_30 = arith.constant dense<0xFF800000> : vector<4x8xf32>
    %37 = vector.multi_reduction <maximumf>, %36, %cst_30 [2] : vector<4x8x8xf32> to vector<4x8xf32>
    %38 = vector.shape_cast %37 : vector<4x8xf32> to vector<4x8x1xf32>
    %39 = vector.broadcast %38 : vector<4x8x1xf32> to vector<4x8x8xf32>
    %40 = arith.subf %36, %39 : vector<4x8x8xf32>
    %41 = math.exp %40 : vector<4x8x8xf32>
    %cst_31 = arith.constant dense<0.000000e+00> : vector<4x8xf32>
    %42 = vector.multi_reduction <add>, %41, %cst_31 [2] : vector<4x8x8xf32> to vector<4x8xf32>
    %43 = vector.shape_cast %42 : vector<4x8xf32> to vector<4x8x1xf32>
    %44 = tpu.reciprocal %43 {approx = true} : vector<4x8x1xf32> -> vector<4x8x1xf32>
    %45 = vector.broadcast %44 : vector<4x8x1xf32> to vector<4x8x8xf32>
    %46 = arith.mulf %41, %45 : vector<4x8x8xf32>
    %47 = arith.truncf %46 : vector<4x8x8xf32> to vector<4x8x8xbf16>
    %48 = arith.truncf %28 : vector<4x8x8xf32> to vector<4x8x8xbf16>
    "tpu.trace_start"() <{level = 10 : i32, message = "hqk,hkd->hqd"}> : () -> ()
    %cst_32 = arith.constant dense<0.000000e+00> : vector<4x8x8xf32>
    %49 = tpu.matmul %47, %48, %cst_32 {dimension_numbers = #tpu.dot_dimension_numbers<[2], [1], [1], [2], [0, 0, 0, 1, 1, 2], [0], [0]>} : vector<4x8x8xbf16>, vector<4x8x8xbf16>, vector<4x8x8xf32> -> vector<4x8x8xf32>
    "tpu.trace_stop"() : () -> ()
    %50 = arith.truncf %49 : vector<4x8x8xf32> to vector<4x8x8xbf16>
    %c0_33 = arith.constant 0 : index
    %c0_34 = arith.constant 0 : index
    %c0_35 = arith.constant 0 : index
    %51 = vector.load %arg11[%c0_33, %c0_34, %c0_35] : memref<4x8x32xbf16, #tpu.memory_space<vmem>>, vector<4x8x32xbf16>
    "tpu.trace_start"() <{level = 10 : i32, message = "hqd,hde->hqe"}> : () -> ()
    %cst_36 = arith.constant dense<0.000000e+00> : vector<4x8x32xf32>
    %52 = tpu.matmul %50, %51, %cst_36 {dimension_numbers = #tpu.dot_dimension_numbers<[2], [1], [1], [2], [0, 0, 0, 1, 1, 2], [0], [0]>} : vector<4x8x8xbf16>, vector<4x8x32xbf16>, vector<4x8x32xf32> -> vector<4x8x32xf32>
    "tpu.trace_stop"() : () -> ()
    %cst_37 = arith.constant dense<0.000000e+00> : vector<8x32xf32>
    %53 = vector.multi_reduction <add>, %52, %cst_37 [0] : vector<4x8x32xf32> to vector<8x32xf32>
    %c0_38 = arith.constant 0 : index
    %c0_39 = arith.constant 0 : index
    %54 = vector.load %arg12[%c0_38, %c0_39] : memref<1x32xf32, #tpu.memory_space<vmem>>, vector<1x32xf32>
    %55 = vector.broadcast %54 : vector<1x32xf32> to vector<8x32xf32>
    %56 = arith.addf %53, %55 : vector<8x32xf32>
    %57 = arith.addf %56, %1 : vector<8x32xf32>
    %c0_40 = arith.constant 0 : index
    %c0_41 = arith.constant 0 : index
    %58 = vector.load %arg13[%c0_40, %c0_41] : memref<1x32xf32, #tpu.memory_space<vmem>>, vector<1x32xf32>
    %c0_42 = arith.constant 0 : index
    %c0_43 = arith.constant 0 : index
    %59 = vector.load %arg14[%c0_42, %c0_43] : memref<1x32xf32, #tpu.memory_space<vmem>>, vector<1x32xf32>
    %cst_44 = arith.constant dense<0.000000e+00> : vector<8xf32>
    %60 = vector.multi_reduction <add>, %57, %cst_44 [1] : vector<8x32xf32> to vector<8xf32>
    %61 = vector.shape_cast %60 : vector<8xf32> to vector<8x1xf32>
    %cst_45 = arith.constant 3.200000e+01 : f32
    %62 = vector.broadcast %cst_45 : f32 to vector<8x1xf32>
    %63 = arith.divf %61, %62 : vector<8x1xf32>
    %64 = vector.broadcast %63 : vector<8x1xf32> to vector<8x32xf32>
    %65 = arith.subf %57, %64 : vector<8x32xf32>
    %66 = arith.mulf %65, %65 : vector<8x32xf32>
    %cst_46 = arith.constant dense<0.000000e+00> : vector<8xf32>
    %67 = vector.multi_reduction <add>, %66, %cst_46 [1] : vector<8x32xf32> to vector<8xf32>
    %68 = vector.shape_cast %67 : vector<8xf32> to vector<8x1xf32>
    %cst_47 = arith.constant 3.200000e+01 : f32
    %69 = vector.broadcast %cst_47 : f32 to vector<8x1xf32>
    %70 = arith.divf %68, %69 : vector<8x1xf32>
    %cst_48 = arith.constant 9.99999996E-13 : f32
    %71 = vector.broadcast %cst_48 : f32 to vector<8x1xf32>
    %72 = arith.addf %70, %71 : vector<8x1xf32>
    %73 = math.rsqrt %72 : vector<8x1xf32>
    %74 = vector.broadcast %73 : vector<8x1xf32> to vector<8x32xf32>
    %75 = arith.mulf %65, %74 : vector<8x32xf32>
    %76 = vector.broadcast %58 : vector<1x32xf32> to vector<8x32xf32>
    %77 = arith.mulf %76, %75 : vector<8x32xf32>
    %78 = vector.broadcast %59 : vector<1x32xf32> to vector<8x32xf32>
    %79 = arith.addf %77, %78 : vector<8x32xf32>
    %80 = arith.truncf %79 : vector<8x32xf32> to vector<8x32xbf16>
    %cst_49 = arith.constant 0.000000e+00 : f32
    %81 = vector.broadcast %cst_49 : f32 to vector<8x32xf32>
    %c0_50 = arith.constant 0 : index
    %c0_51 = arith.constant 0 : index
    %82 = vector.load %arg15[%c0_50, %c0_51] : memref<32x128xbf16, #tpu.memory_space<vmem>>, vector<32x128xbf16>
    %c0_52 = arith.constant 0 : index
    %c0_53 = arith.constant 0 : index
    %83 = vector.load %arg16[%c0_52, %c0_53] : memref<1x128xf32, #tpu.memory_space<vmem>>, vector<1x128xf32>
    %cst_54 = arith.constant dense<0.000000e+00> : vector<8x128xf32>
    %84 = tpu.matmul %80, %82, %cst_54 {dimension_numbers = #tpu.dot_dimension_numbers<[1], [0], [0], [1], [0, 0, 1, 1], [], []>} : vector<8x32xbf16>, vector<32x128xbf16>, vector<8x128xf32> -> vector<8x128xf32>
    %85 = vector.broadcast %83 : vector<1x128xf32> to vector<8x128xf32>
    %86 = arith.addf %84, %85 : vector<8x128xf32>
    %cst_55 = arith.constant 5.000000e-01 : f32
    %87 = vector.broadcast %cst_55 : f32 to vector<8x128xf32>
    %88 = arith.mulf %86, %87 : vector<8x128xf32>
    %cst_56 = arith.constant 1.41421354 : f32
    %89 = vector.broadcast %cst_56 : f32 to vector<8x128xf32>
    %90 = arith.divf %86, %89 : vector<8x128xf32>
    %91 = math.erf %90 : vector<8x128xf32>
    %cst_57 = arith.constant 1.000000e+00 : f32
    %92 = vector.broadcast %cst_57 : f32 to vector<8x128xf32>
    %93 = arith.addf %92, %91 : vector<8x128xf32>
    %94 = arith.mulf %88, %93 : vector<8x128xf32>
    %95 = arith.truncf %94 : vector<8x128xf32> to vector<8x128xbf16>
    %c0_58 = arith.constant 0 : index
    %c0_59 = arith.constant 0 : index
    %96 = vector.load %arg17[%c0_58, %c0_59] : memref<128x32xbf16, #tpu.memory_space<vmem>>, vector<128x32xbf16>
    %cst_60 = arith.constant dense<0.000000e+00> : vector<8x32xf32>
    %97 = tpu.matmul %95, %96, %cst_60 {dimension_numbers = #tpu.dot_dimension_numbers<[1], [0], [0], [1], [0, 0, 1, 1], [], []>} : vector<8x128xbf16>, vector<128x32xbf16>, vector<8x32xf32> -> vector<8x32xf32>
    %98 = arith.addf %81, %97 : vector<8x32xf32>
    %c0_61 = arith.constant 0 : index
    %c0_62 = arith.constant 0 : index
    %99 = vector.load %arg18[%c0_61, %c0_62] : memref<1x32xf32, #tpu.memory_space<vmem>>, vector<1x32xf32>
    %100 = vector.broadcast %99 : vector<1x32xf32> to vector<8x32xf32>
    %101 = arith.addf %98, %100 : vector<8x32xf32>
    %102 = arith.addf %101, %79 : vector<8x32xf32>
    %c0_63 = arith.constant 0 : index
    %c0_64 = arith.constant 0 : index
    %103 = vector.load %arg19[%c0_63, %c0_64] : memref<1x32xf32, #tpu.memory_space<vmem>>, vector<1x32xf32>
    %c0_65 = arith.constant 0 : index
    %c0_66 = arith.constant 0 : index
    %104 = vector.load %arg20[%c0_65, %c0_66] : memref<1x32xf32, #tpu.memory_space<vmem>>, vector<1x32xf32>
    %cst_67 = arith.constant dense<0.000000e+00> : vector<8xf32>
    %105 = vector.multi_reduction <add>, %102, %cst_67 [1] : vector<8x32xf32> to vector<8xf32>
    %106 = vector.shape_cast %105 : vector<8xf32> to vector<8x1xf32>
    %cst_68 = arith.constant 3.200000e+01 : f32
    %107 = vector.broadcast %cst_68 : f32 to vector<8x1xf32>
    %108 = arith.divf %106, %107 : vector<8x1xf32>
    %109 = vector.broadcast %108 : vector<8x1xf32> to vector<8x32xf32>
    %110 = arith.subf %102, %109 : vector<8x32xf32>
    %111 = arith.mulf %110, %110 : vector<8x32xf32>
    %cst_69 = arith.constant dense<0.000000e+00> : vector<8xf32>
    %112 = vector.multi_reduction <add>, %111, %cst_69 [1] : vector<8x32xf32> to vector<8xf32>
    %113 = vector.shape_cast %112 : vector<8xf32> to vector<8x1xf32>
    %cst_70 = arith.constant 3.200000e+01 : f32
    %114 = vector.broadcast %cst_70 : f32 to vector<8x1xf32>
    %115 = arith.divf %113, %114 : vector<8x1xf32>
    %cst_71 = arith.constant 9.99999996E-13 : f32
    %116 = vector.broadcast %cst_71 : f32 to vector<8x1xf32>
    %117 = arith.addf %115, %116 : vector<8x1xf32>
    %118 = math.rsqrt %117 : vector<8x1xf32>
    %119 = vector.broadcast %118 : vector<8x1xf32> to vector<8x32xf32>
    %120 = arith.mulf %110, %119 : vector<8x32xf32>
    %121 = vector.broadcast %103 : vector<1x32xf32> to vector<8x32xf32>
    %122 = arith.mulf %121, %120 : vector<8x32xf32>
    %123 = vector.broadcast %104 : vector<1x32xf32> to vector<8x32xf32>
    %124 = arith.addf %122, %123 : vector<8x32xf32>
    %c0_72 = arith.constant 0 : index
    %c0_73 = arith.constant 0 : index
    %c0_74 = arith.constant 0 : index
    %125 = vector.load %arg21[%c0_72, %c0_73, %c0_74] : memref<1x8x32xf32, #tpu.memory_space<vmem>>, vector<1x8x32xf32>
    %126 = vector.shape_cast %125 : vector<1x8x32xf32> to vector<8x32xf32>
    %127 = vector.shape_cast %124 : vector<8x32xf32> to vector<1x8x32xf32>
    tpu.vector_store %arg21[%c0_72, %c0_73, %c0_74], %127 {strides = array<i32>} : memref<1x8x32xf32, #tpu.memory_space<vmem>>, vector<1x8x32xf32>,
    return
  }
  func.func @transform_0(%arg0: i32, %arg1: i32) -> (i32, i32, i32) {
    %c0_i32 = arith.constant 0 : i32
    %c0_i32_0 = arith.constant 0 : i32
    return %arg0, %arg1, %c0_i32 : i32, i32, i32
  }
  func.func @transform_1(%arg0: i32, %arg1: i32) -> (i32, i32, i32) {
    %c0_i32 = arith.constant 0 : i32
    %c0_i32_0 = arith.constant 0 : i32
    %c0_i32_1 = arith.constant 0 : i32
    return %arg0, %c0_i32, %c0_i32_0 : i32, i32, i32
  }
  func.func @transform_2(%arg0: i32, %arg1: i32) -> (i32, i32, i32) {
    %c0_i32 = arith.constant 0 : i32
    %c0_i32_0 = arith.constant 0 : i32
    %c0_i32_1 = arith.constant 0 : i32
    return %arg0, %c0_i32, %c0_i32_0 : i32, i32, i32
  }
  func.func @transform_3(%arg0: i32, %arg1: i32) -> (i32, i32, i32) {
    %c0_i32 = arith.constant 0 : i32
    %c0_i32_0 = arith.constant 0 : i32
    %c0_i32_1 = arith.constant 0 : i32
    %c0_i32_2 = arith.constant 0 : i32
    return %c0_i32, %c0_i32_0, %c0_i32_1 : i32, i32, i32
  }
  func.func @transform_4(%arg0: i32, %arg1: i32) -> (i32, i32, i32) {
    %c0_i32 = arith.constant 0 : i32
    %c0_i32_0 = arith.constant 0 : i32
    %c0_i32_1 = arith.constant 0 : i32
    %c0_i32_2 = arith.constant 0 : i32
    return %c0_i32, %c0_i32_0, %c0_i32_1 : i32, i32, i32
  }
  func.func @transform_5(%arg0: i32, %arg1: i32) -> (i32, i32, i32) {
    %c0_i32 = arith.constant 0 : i32
    %c0_i32_0 = arith.constant 0 : i32
    %c0_i32_1 = arith.constant 0 : i32
    %c0_i32_2 = arith.constant 0 : i32
    return %c0_i32, %c0_i32_0, %c0_i32_1 : i32, i32, i32
  }
  func.func @transform_6(%arg0: i32, %arg1: i32) -> (i32, i32, i32) {
    %c0_i32 = arith.constant 0 : i32
    %c0_i32_0 = arith.constant 0 : i32
    %c0_i32_1 = arith.constant 0 : i32
    %c0_i32_2 = arith.constant 0 : i32
    return %c0_i32, %c0_i32_0, %c0_i32_1 : i32, i32, i32
  }
  func.func @transform_7(%arg0: i32, %arg1: i32) -> (i32, i32, i32) {
    %c0_i32 = arith.constant 0 : i32
    %c0_i32_0 = arith.constant 0 : i32
    %c0_i32_1 = arith.constant 0 : i32
    %c0_i32_2 = arith.constant 0 : i32
    return %c0_i32, %c0_i32_0, %c0_i32_1 : i32, i32, i32
  }
  func.func @transform_8(%arg0: i32, %arg1: i32) -> (i32, i32, i32) {
    %c0_i32 = arith.constant 0 : i32
    %c0_i32_0 = arith.constant 0 : i32
    %c0_i32_1 = arith.constant 0 : i32
    %c0_i32_2 = arith.constant 0 : i32
    return %c0_i32, %c0_i32_0, %c0_i32_1 : i32, i32, i32
  }
  func.func @transform_9(%arg0: i32, %arg1: i32) -> (i32, i32, i32) {
    %c0_i32 = arith.constant 0 : i32
    %c0_i32_0 = arith.constant 0 : i32
    %c0_i32_1 = arith.constant 0 : i32
    %c0_i32_2 = arith.constant 0 : i32
    return %c0_i32, %c0_i32_0, %c0_i32_1 : i32, i32, i32
  }
  func.func @transform_10(%arg0: i32, %arg1: i32) -> (i32, i32) {
    %c0_i32 = arith.constant 0 : i32
    %c0_i32_0 = arith.constant 0 : i32
    %c0_i32_1 = arith.constant 0 : i32
    return %c0_i32, %c0_i32_0 : i32, i32
  }
  func.func @transform_11(%arg0: i32, %arg1: i32) -> (i32, i32) {
    %c0_i32 = arith.constant 0 : i32
    %c0_i32_0 = arith.constant 0 : i32
    %c0_i32_1 = arith.constant 0 : i32
    return %c0_i32, %c0_i32_0 : i32, i32
  }
  func.func @transform_12(%arg0: i32, %arg1: i32) -> (i32, i32) {
    %c0_i32 = arith.constant 0 : i32
    %c0_i32_0 = arith.constant 0 : i32
    %c0_i32_1 = arith.constant 0 : i32
    return %c0_i32, %c0_i32_0 : i32, i32
  }
  func.func @transform_13(%arg0: i32, %arg1: i32) -> (i32, i32) {
    %c0_i32 = arith.constant 0 : i32
    %c0_i32_0 = arith.constant 0 : i32
    %c0_i32_1 = arith.constant 0 : i32
    return %c0_i32, %c0_i32_0 : i32, i32
  }
  func.func @transform_14(%arg0: i32, %arg1: i32) -> (i32, i32) {
    %c0_i32 = arith.constant 0 : i32
    %c0_i32_0 = arith.constant 0 : i32
    %c0_i32_1 = arith.constant 0 : i32
    return %c0_i32, %c0_i32_0 : i32, i32
  }
  func.func @transform_15(%arg0: i32, %arg1: i32) -> (i32, i32) {
    %c0_i32 = arith.constant 0 : i32
    %c0_i32_0 = arith.constant 0 : i32
    %c0_i32_1 = arith.constant 0 : i32
    return %c0_i32, %c0_i32_0 : i32, i32
  }
  func.func @transform_16(%arg0: i32, %arg1: i32) -> (i32, i32) {
    %c0_i32 = arith.constant 0 : i32
    %c0_i32_0 = arith.constant 0 : i32
    %c0_i32_1 = arith.constant 0 : i32
    return %c0_i32, %c0_i32_0 : i32, i32
  }
  func.func @transform_17(%arg0: i32, %arg1: i32) -> (i32, i32) {
    %c0_i32 = arith.constant 0 : i32
    %c0_i32_0 = arith.constant 0 : i32
    %c0_i32_1 = arith.constant 0 : i32
    return %c0_i32, %c0_i32_0 : i32, i32
  }
  func.func @transform_18(%arg0: i32, %arg1: i32) -> (i32, i32) {
    %c0_i32 = arith.constant 0 : i32
    %c0_i32_0 = arith.constant 0 : i32
    %c0_i32_1 = arith.constant 0 : i32
    return %c0_i32, %c0_i32_0 : i32, i32
  }
  func.func @transform_19(%arg0: i32, %arg1: i32) -> (i32, i32, i32) {
    %c0_i32 = arith.constant 0 : i32
    %c0_i32_0 = arith.constant 0 : i32
    return %arg0, %arg1, %c0_i32 : i32, i32, i32
  }
}

</mosaic_0001>

<llo_original>
// kernel: tpu_custom_call.1
$region0: #{tpu_custom_call.1}
  #allocation0 [shape = 'u32[]', space=smem, size = 0x4, offset = 0x4, fixed_abs, tag = 'smem constant byte address 0x4 - core index']
  #allocation1 [shape = 'u32[144,128]{1,0:T(1,128)}', space=vmem, size = 0x12000, scoped, tag = 'internal scratch']
  %s0 = inlined_call_operand.vmem [shape: f32[2,8,32], index: 0, kind: input, shape index: {}]
  %s1 = inlined_call_operand.vmem [shape: f32[2,8,32], index: 1, kind: input, shape index: {}]
  %s2 = inlined_call_operand.vmem [shape: f32[2,1,8], index: 2, kind: input, shape index: {}]
  %s3 = inlined_call_operand.vmem [shape: bf16[4,32,8], index: 3, kind: input, shape index: {}]
  %s4 = inlined_call_operand.vmem [shape: f32[4,1,8], index: 4, kind: input, shape index: {}]
  %s5 = inlined_call_operand.vmem [shape: bf16[4,32,8], index: 5, kind: input, shape index: {}]
  %s6 = inlined_call_operand.vmem [shape: f32[4,1,8], index: 6, kind: input, shape index: {}]
  %s7 = inlined_call_operand.vmem [shape: bf16[4,32,8], index: 7, kind: input, shape index: {}]
  %s8 = inlined_call_operand.vmem [shape: f32[4,1,8], index: 8, kind: input, shape index: {}]
  %s9 = inlined_call_operand.vmem [shape: bf16[4,8,32], index: 9, kind: input, shape index: {}]
  %s10 = inlined_call_operand.vmem [shape: f32[1,32], index: 10, kind: input, shape index: {}]
  %s11 = inlined_call_operand.vmem [shape: f32[1,32], index: 11, kind: input, shape index: {}]
  %s12 = inlined_call_operand.vmem [shape: f32[1,32], index: 12, kind: input, shape index: {}]
  %s13 = inlined_call_operand.vmem [shape: bf16[32,128], index: 13, kind: input, shape index: {}]
  %s14 = inlined_call_operand.vmem [shape: f32[1,128], index: 14, kind: input, shape index: {}]
  %s15 = inlined_call_operand.vmem [shape: bf16[128,32], index: 15, kind: input, shape index: {}]
  %s16 = inlined_call_operand.vmem [shape: f32[1,32], index: 16, kind: input, shape index: {}]
  %s17 = inlined_call_operand.vmem [shape: f32[1,32], index: 17, kind: input, shape index: {}]
  %s18 = inlined_call_operand.vmem [shape: f32[1,32], index: 18, kind: input, shape index: {}]
  %s19 = inlined_call_operand.hbm [shape: f32[2,8,32], index: 19, kind: output, shape index: {}]
  %s20 = sld [smem:[#allocation0]]
  $region109: #{tpu_custom_call.1} parent=0
    _
  %s22 = ssub.s32 1, %s20
  %s23 = scalar_select 0, %s22, %s20
  $region1: #{tpu_custom_call.1} parent=0
    #allocation2 [shape = 'u8[8192]{0}', space=vmem, size = 0x2000, scoped, tag = 'output window, operand 0']
    #allocation3 [shape = 's32[2]{0}', space=sflag, size = 0x8, scoped, tag = 'scoped memory for tpu_custom_call.1']
    %24 = vsyncpa [#allocation3], 0
    %s25 = scalar_lea.sflag [#allocation3], 1
    %26 = vsyncpa %s25, 0
    loop: start=0, step=1, limit=4
    $region2: #{tpu_custom_call.1} parent=1 // loop_pre_header
      _
    $region3: #{tpu_custom_call.1} parent=1 // loop_header
      %s28 = sphi 0, %s32
      %p29 = scmp.ge.s32.totalorder %s28, 4
      %s35 = sphi 0, %s47
      %s36 = sphi 0, %s43
      %s37 = sphi 0, %s35
      %s38 = sphi 0, %s36
      %s39 = sphi 0, %s37
      %s40 = sphi 0, %s38
      %s52 = sphi 0, %s54
      %s55 = sphi 0, %s52
      %s56 = sphi 0, %s55
      %s72 = sphi 0, %s56
      %s78 = sphi 0, %s80
      %s81 = sphi 0, %s78
      %s82 = sphi 0, %s81
      %s98 = sphi 0, %s82
      %s104 = sphi 0, %s106
      %s107 = sphi 0, %s104
      %s108 = sphi 0, %s107
      %s124 = sphi 0, %s108
      %s128 = sphi 0, %s128
      %s130 = sphi 0, %s128
      %s131 = sphi 0, %s130
      %s145 = sphi 0, %s131
      %s149 = sphi 0, %s149
      %s151 = sphi 0, %s149
      %s152 = sphi 0, %s151
      %s166 = sphi 0, %s152
      %s170 = sphi 0, %s170
      %s172 = sphi 0, %s170
      %s173 = sphi 0, %s172
      %s187 = sphi 0, %s173
      %s191 = sphi 0, %s191
      %s193 = sphi 0, %s191
      %s194 = sphi 0, %s193
      %s208 = sphi 0, %s194
      %s212 = sphi 0, %s212
      %s214 = sphi 0, %s212
      %s215 = sphi 0, %s214
      %s229 = sphi 0, %s215
      %s233 = sphi 0, %s233
      %s235 = sphi 0, %s233
      %s236 = sphi 0, %s235
      %s250 = sphi 0, %s236
      %s254 = sphi 0, %s254
      %s256 = sphi 0, %s254
      %s257 = sphi 0, %s256
      %s271 = sphi 0, %s257
      %s275 = sphi 0, %s275
      %s277 = sphi 0, %s275
      %s278 = sphi 0, %s277
      %s292 = sphi 0, %s278
      %s296 = sphi 0, %s296
      %s298 = sphi 0, %s296
      %s299 = sphi 0, %s298
      %s313 = sphi 0, %s299
      %s317 = sphi 0, %s317
      %s319 = sphi 0, %s317
      %s320 = sphi 0, %s319
      %s334 = sphi 0, %s320
      %s338 = sphi 0, %s338
      %s340 = sphi 0, %s338
      %s341 = sphi 0, %s340
      %s355 = sphi 0, %s341
      %s359 = sphi 0, %s359
      %s361 = sphi 0, %s359
      %s362 = sphi 0, %s361
      %s376 = sphi 0, %s362
      %s380 = sphi 0, %s380
      %s382 = sphi 0, %s380
      %s383 = sphi 0, %s382
      %s397 = sphi 0, %s383
      %s401 = sphi 0, %s401
      %s403 = sphi 0, %s401
      %s404 = sphi 0, %s403
      %s418 = sphi 0, %s404
      %s422 = sphi 0, %s422
      %s424 = sphi 0, %s422
      %s425 = sphi 0, %s424
      %s439 = sphi 0, %s425
      %s443 = sphi 0, %s443
      %s445 = sphi 0, %s443
      %s446 = sphi 0, %s445
      %s460 = sphi 0, %s446
      %s468 = sphi 0, %s470
      %s471 = sphi 0, %s468
      %s472 = sphi 0, %s471
      %s488 = sphi 0, %s472
    $region4: #{tpu_custom_call.1} parent=1 // loop_header_branch
      %31 = sbr.rel (%p29) target = $region8
    $region5: #{tpu_custom_call.1} parent=1 // loop_body
      %s33 = ssub.s32 %s28, 1
      %s34 = ssub.s32 %s28, 2
      %s41 = sadd.s32 1, %s36
      %p42 = scmp.ge.s32.totalorder %s41, 1
      %s43 = scalar_select %p42, 0, %s41
      %s44 = sadd.s32 1, %s35
      %s45 = scalar_select %p42, %s44, %s35
      %p46 = scmp.ge.s32.totalorder %s45, 2
      %s47 = scalar_select %p46, 0, %s45
      %s48 = ssub.s32 %s35, %s47
      %s49 = ssub.s32 %s36, %s43
      %s50 = sor.u32 %s48, %s49
      %p51 = scmp.eq.s32.totalorder %s50, 0
      %s53 = sadd.s32 %s52, 1
      %s54 = scalar_select %p51, %s52, %s53
      %p57 = pneg %p51
      %p58 = scmp.eq.s32.totalorder %s28, 1
      %p59 = por %p57, %p58
      %p60 = scmp.ne.s32.totalorder %s52, %s55
      %p61 = scmp.eq.s32.totalorder %s28, 0
      %p62 = por %p60, %p61
      %p63 = scmp.ne.s32.totalorder %s52, %s55
      %p64 = scmp.eq.s32.totalorder %s33, 1
      %p65 = por %p63, %p64
      %p66 = scmp.ne.s32.totalorder %s55, %s56
      %p67 = scmp.eq.s32.totalorder %s33, 0
      %p68 = por %p66, %p67
      %p69 = scmp.ne.s32.totalorder %s55, %s56
      %p70 = scmp.eq.s32.totalorder %s34, 1
      %p71 = por %p69, %p70
      %p73 = scmp.ne.s32.totalorder %s56, %s72
      %p74 = scmp.eq.s32.totalorder %s34, 0
      %p75 = por %p73, %p74
      %s76 = ssub.s32 %s35, %s47
      %p77 = scmp.eq.s32.totalorder %s76, 0
      %s79 = sadd.s32 %s78, 1
      %s80 = scalar_select %p77, %s78, %s79
      %p83 = pneg %p77
      %p84 = scmp.eq.s32.totalorder %s28, 1
      %p85 = por %p83, %p84
      %p86 = scmp.ne.s32.totalorder %s78, %s81
      %p87 = scmp.eq.s32.totalorder %s28, 0
      %p88 = por %p86, %p87
      %p89 = scmp.ne.s32.totalorder %s78, %s81
      %p90 = scmp.eq.s32.totalorder %s33, 1
      %p91 = por %p89, %p90
      %p92 = scmp.ne.s32.totalorder %s81, %s82
      %p93 = scmp.eq.s32.totalorder %s33, 0
      %p94 = por %p92, %p93
      %p95 = scmp.ne.s32.totalorder %s81, %s82
      %p96 = scmp.eq.s32.totalorder %s34, 1
      %p97 = por %p95, %p96
      %p99 = scmp.ne.s32.totalorder %s82, %s98
      %p100 = scmp.eq.s32.totalorder %s34, 0
      %p101 = por %p99, %p100
      %s102 = ssub.s32 %s35, %s47
      %p103 = scmp.eq.s32.totalorder %s102, 0
      %s105 = sadd.s32 %s104, 1
      %s106 = scalar_select %p103, %s104, %s105
      %p109 = pneg %p103
      %p110 = scmp.eq.s32.totalorder %s28, 1
      %p111 = por %p109, %p110
      %p112 = scmp.ne.s32.totalorder %s104, %s107
      %p113 = scmp.eq.s32.totalorder %s28, 0
      %p114 = por %p112, %p113
      %p115 = scmp.ne.s32.totalorder %s104, %s107
      %p116 = scmp.eq.s32.totalorder %s33, 1
      %p117 = por %p115, %p116
      %p118 = scmp.ne.s32.totalorder %s107, %s108
      %p119 = scmp.eq.s32.totalorder %s33, 0
      %p120 = por %p118, %p119
      %p121 = scmp.ne.s32.totalorder %s107, %s108
      %p122 = scmp.eq.s32.totalorder %s34, 1
      %p123 = por %p121, %p122
      %p125 = scmp.ne.s32.totalorder %s108, %s124
      %p126 = scmp.eq.s32.totalorder %s34, 0
      %p127 = por %p125, %p126
      %s129 = sadd.s32 %s128, 1
      %p132 = scmp.eq.s32.totalorder %s28, 1
      %p133 = scmp.ne.s32.totalorder %s128, %s130
      %p134 = scmp.eq.s32.totalorder %s28, 0
      %p135 = por %p133, %p134
      %p136 = scmp.ne.s32.totalorder %s128, %s130
      %p137 = scmp.eq.s32.totalorder %s33, 1
      %p138 = por %p136, %p137
      %p139 = scmp.ne.s32.totalorder %s130, %s131
      %p140 = scmp.eq.s32.totalorder %s33, 0
      %p141 = por %p139, %p140
      %p142 = scmp.ne.s32.totalorder %s130, %s131
      %p143 = scmp.eq.s32.totalorder %s34, 1
      %p144 = por %p142, %p143
      %p146 = scmp.ne.s32.totalorder %s131, %s145
      %p147 = scmp.eq.s32.totalorder %s34, 0
      %p148 = por %p146, %p147
      %s150 = sadd.s32 %s149, 1
      %p153 = scmp.eq.s32.totalorder %s28, 1
      %p154 = scmp.ne.s32.totalorder %s149, %s151
      %p155 = scmp.eq.s32.totalorder %s28, 0
      %p156 = por %p154, %p155
      %p157 = scmp.ne.s32.totalorder %s149, %s151
      %p158 = scmp.eq.s32.totalorder %s33, 1
      %p159 = por %p157, %p158
      %p160 = scmp.ne.s32.totalorder %s151, %s152
      %p161 = scmp.eq.s32.totalorder %s33, 0
      %p162 = por %p160, %p161
      %p163 = scmp.ne.s32.totalorder %s151, %s152
      %p164 = scmp.eq.s32.totalorder %s34, 1
      %p165 = por %p163, %p164
      %p167 = scmp.ne.s32.totalorder %s152, %s166
      %p168 = scmp.eq.s32.totalorder %s34, 0
      %p169 = por %p167, %p168
      %s171 = sadd.s32 %s170, 1
      %p174 = scmp.eq.s32.totalorder %s28, 1
      %p175 = scmp.ne.s32.totalorder %s170, %s172
      %p176 = scmp.eq.s32.totalorder %s28, 0
      %p177 = por %p175, %p176
      %p178 = scmp.ne.s32.totalorder %s170, %s172
      %p179 = scmp.eq.s32.totalorder %s33, 1
      %p180 = por %p178, %p179
      %p181 = scmp.ne.s32.totalorder %s172, %s173
      %p182 = scmp.eq.s32.totalorder %s33, 0
      %p183 = por %p181, %p182
      %p184 = scmp.ne.s32.totalorder %s172, %s173
      %p185 = scmp.eq.s32.totalorder %s34, 1
      %p186 = por %p184, %p185
      %p188 = scmp.ne.s32.totalorder %s173, %s187
      %p189 = scmp.eq.s32.totalorder %s34, 0
      %p190 = por %p188, %p189
      %s192 = sadd.s32 %s191, 1
      %p195 = scmp.eq.s32.totalorder %s28, 1
      %p196 = scmp.ne.s32.totalorder %s191, %s193
      %p197 = scmp.eq.s32.totalorder %s28, 0
      %p198 = por %p196, %p197
      %p199 = scmp.ne.s32.totalorder %s191, %s193
      %p200 = scmp.eq.s32.totalorder %s33, 1
      %p201 = por %p199, %p200
      %p202 = scmp.ne.s32.totalorder %s193, %s194
      %p203 = scmp.eq.s32.totalorder %s33, 0
      %p204 = por %p202, %p203
      %p205 = scmp.ne.s32.totalorder %s193, %s194
      %p206 = scmp.eq.s32.totalorder %s34, 1
      %p207 = por %p205, %p206
      %p209 = scmp.ne.s32.totalorder %s194, %s208
      %p210 = scmp.eq.s32.totalorder %s34, 0
      %p211 = por %p209, %p210
      %s213 = sadd.s32 %s212, 1
      %p216 = scmp.eq.s32.totalorder %s28, 1
      %p217 = scmp.ne.s32.totalorder %s212, %s214
      %p218 = scmp.eq.s32.totalorder %s28, 0
      %p219 = por %p217, %p218
      %p220 = scmp.ne.s32.totalorder %s212, %s214
      %p221 = scmp.eq.s32.totalorder %s33, 1
      %p222 = por %p220, %p221
      %p223 = scmp.ne.s32.totalorder %s214, %s215
      %p224 = scmp.eq.s32.totalorder %s33, 0
      %p225 = por %p223, %p224
      %p226 = scmp.ne.s32.totalorder %s214, %s215
      %p227 = scmp.eq.s32.totalorder %s34, 1
      %p228 = por %p226, %p227
      %p230 = scmp.ne.s32.totalorder %s215, %s229
      %p231 = scmp.eq.s32.totalorder %s34, 0
      %p232 = por %p230, %p231
      %s234 = sadd.s32 %s233, 1
      %p237 = scmp.eq.s32.totalorder %s28, 1
      %p238 = scmp.ne.s32.totalorder %s233, %s235
      %p239 = scmp.eq.s32.totalorder %s28, 0
      %p240 = por %p238, %p239
      %p241 = scmp.ne.s32.totalorder %s233, %s235
      %p242 = scmp.eq.s32.totalorder %s33, 1
      %p243 = por %p241, %p242
      %p244 = scmp.ne.s32.totalorder %s235, %s236
      %p245 = scmp.eq.s32.totalorder %s33, 0
      %p246 = por %p244, %p245
      %p247 = scmp.ne.s32.totalorder %s235, %s236
      %p248 = scmp.eq.s32.totalorder %s34, 1
      %p249 = por %p247, %p248
      %p251 = scmp.ne.s32.totalorder %s236, %s250
      %p252 = scmp.eq.s32.totalorder %s34, 0
      %p253 = por %p251, %p252
      %s255 = sadd.s32 %s254, 1
      %p258 = scmp.eq.s32.totalorder %s28, 1
      %p259 = scmp.ne.s32.totalorder %s254, %s256
      %p260 = scmp.eq.s32.totalorder %s28, 0
      %p261 = por %p259, %p260
      %p262 = scmp.ne.s32.totalorder %s254, %s256
      %p263 = scmp.eq.s32.totalorder %s33, 1
      %p264 = por %p262, %p263
      %p265 = scmp.ne.s32.totalorder %s256, %s257
      %p266 = scmp.eq.s32.totalorder %s33, 0
      %p267 = por %p265, %p266
      %p268 = scmp.ne.s32.totalorder %s256, %s257
      %p269 = scmp.eq.s32.totalorder %s34, 1
      %p270 = por %p268, %p269
      %p272 = scmp.ne.s32.totalorder %s257, %s271
      %p273 = scmp.eq.s32.totalorder %s34, 0
      %p274 = por %p272, %p273
      %s276 = sadd.s32 %s275, 1
      %p279 = scmp.eq.s32.totalorder %s28, 1
      %p280 = scmp.ne.s32.totalorder %s275, %s277
      %p281 = scmp.eq.s32.totalorder %s28, 0
      %p282 = por %p280, %p281
      %p283 = scmp.ne.s32.totalorder %s275, %s277
      %p284 = scmp.eq.s32.totalorder %s33, 1
      %p285 = por %p283, %p284
      %p286 = scmp.ne.s32.totalorder %s277, %s278
      %p287 = scmp.eq.s32.totalorder %s33, 0
      %p288 = por %p286, %p287
      %p289 = scmp.ne.s32.totalorder %s277, %s278
      %p290 = scmp.eq.s32.totalorder %s34, 1
      %p291 = por %p289, %p290
      %p293 = scmp.ne.s32.totalorder %s278, %s292
      %p294 = scmp.eq.s32.totalorder %s34, 0
      %p295 = por %p293, %p294
      %s297 = sadd.s32 %s296, 1
      %p300 = scmp.eq.s32.totalorder %s28, 1
      %p301 = scmp.ne.s32.totalorder %s296, %s298
      %p302 = scmp.eq.s32.totalorder %s28, 0
      %p303 = por %p301, %p302
      %p304 = scmp.ne.s32.totalorder %s296, %s298
      %p305 = scmp.eq.s32.totalorder %s33, 1
      %p306 = por %p304, %p305
      %p307 = scmp.ne.s32.totalorder %s298, %s299
      %p308 = scmp.eq.s32.totalorder %s33, 0
      %p309 = por %p307, %p308
      %p310 = scmp.ne.s32.totalorder %s298, %s299
      %p311 = scmp.eq.s32.totalorder %s34, 1
      %p312 = por %p310, %p311
      %p314 = scmp.ne.s32.totalorder %s299, %s313
      %p315 = scmp.eq.s32.totalorder %s34, 0
      %p316 = por %p314, %p315
      %s318 = sadd.s32 %s317, 1
      %p321 = scmp.eq.s32.totalorder %s28, 1
      %p322 = scmp.ne.s32.totalorder %s317, %s319
      %p323 = scmp.eq.s32.totalorder %s28, 0
      %p324 = por %p322, %p323
      %p325 = scmp.ne.s32.totalorder %s317, %s319
      %p326 = scmp.eq.s32.totalorder %s33, 1
      %p327 = por %p325, %p326
      %p328 = scmp.ne.s32.totalorder %s319, %s320
      %p329 = scmp.eq.s32.totalorder %s33, 0
      %p330 = por %p328, %p329
      %p331 = scmp.ne.s32.totalorder %s319, %s320
      %p332 = scmp.eq.s32.totalorder %s34, 1
      %p333 = por %p331, %p332
      %p335 = scmp.ne.s32.totalorder %s320, %s334
      %p336 = scmp.eq.s32.totalorder %s34, 0
      %p337 = por %p335, %p336
      %s339 = sadd.s32 %s338, 1
      %p342 = scmp.eq.s32.totalorder %s28, 1
      %p343 = scmp.ne.s32.totalorder %s338, %s340
      %p344 = scmp.eq.s32.totalorder %s28, 0
      %p345 = por %p343, %p344
      %p346 = scmp.ne.s32.totalorder %s338, %s340
      %p347 = scmp.eq.s32.totalorder %s33, 1
      %p348 = por %p346, %p347
      %p349 = scmp.ne.s32.totalorder %s340, %s341
      %p350 = scmp.eq.s32.totalorder %s33, 0
      %p351 = por %p349, %p350
      %p352 = scmp.ne.s32.totalorder %s340, %s341
      %p353 = scmp.eq.s32.totalorder %s34, 1
      %p354 = por %p352, %p353
      %p356 = scmp.ne.s32.totalorder %s341, %s355
      %p357 = scmp.eq.s32.totalorder %s34, 0
      %p358 = por %p356, %p357
      %s360 = sadd.s32 %s359, 1
      %p363 = scmp.eq.s32.totalorder %s28, 1
      %p364 = scmp.ne.s32.totalorder %s359, %s361
      %p365 = scmp.eq.s32.totalorder %s28, 0
      %p366 = por %p364, %p365
      %p367 = scmp.ne.s32.totalorder %s359, %s361
      %p368 = scmp.eq.s32.totalorder %s33, 1
      %p369 = por %p367, %p368
      %p370 = scmp.ne.s32.totalorder %s361, %s362
      %p371 = scmp.eq.s32.totalorder %s33, 0
      %p372 = por %p370, %p371
      %p373 = scmp.ne.s32.totalorder %s361, %s362
      %p374 = scmp.eq.s32.totalorder %s34, 1
      %p375 = por %p373, %p374
      %p377 = scmp.ne.s32.totalorder %s362, %s376
      %p378 = scmp.eq.s32.totalorder %s34, 0
      %p379 = por %p377, %p378
      %s381 = sadd.s32 %s380, 1
      %p384 = scmp.eq.s32.totalorder %s28, 1
      %p385 = scmp.ne.s32.totalorder %s380, %s382
      %p386 = scmp.eq.s32.totalorder %s28, 0
      %p387 = por %p385, %p386
      %p388 = scmp.ne.s32.totalorder %s380, %s382
      %p389 = scmp.eq.s32.totalorder %s33, 1
      %p390 = por %p388, %p389
      %p391 = scmp.ne.s32.totalorder %s382, %s383
      %p392 = scmp.eq.s32.totalorder %s33, 0
      %p393 = por %p391, %p392
      %p394 = scmp.ne.s32.totalorder %s382, %s383
      %p395 = scmp.eq.s32.totalorder %s34, 1
      %p396 = por %p394, %p395
      %p398 = scmp.ne.s32.totalorder %s383, %s397
      %p399 = scmp.eq.s32.totalorder %s34, 0
      %p400 = por %p398, %p399
      %s402 = sadd.s32 %s401, 1
      %p405 = scmp.eq.s32.totalorder %s28, 1
      %p406 = scmp.ne.s32.totalorder %s401, %s403
      %p407 = scmp.eq.s32.totalorder %s28, 0
      %p408 = por %p406, %p407
      %p409 = scmp.ne.s32.totalorder %s401, %s403
      %p410 = scmp.eq.s32.totalorder %s33, 1
      %p411 = por %p409, %p410
      %p412 = scmp.ne.s32.totalorder %s403, %s404
      %p413 = scmp.eq.s32.totalorder %s33, 0
      %p414 = por %p412, %p413
      %p415 = scmp.ne.s32.totalorder %s403, %s404
      %p416 = scmp.eq.s32.totalorder %s34, 1
      %p417 = por %p415, %p416
      %p419 = scmp.ne.s32.totalorder %s404, %s418
      %p420 = scmp.eq.s32.totalorder %s34, 0
      %p421 = por %p419, %p420
      %s423 = sadd.s32 %s422, 1
      %p426 = scmp.eq.s32.totalorder %s28, 1
      %p427 = scmp.ne.s32.totalorder %s422, %s424
      %p428 = scmp.eq.s32.totalorder %s28, 0
      %p429 = por %p427, %p428
      %p430 = scmp.ne.s32.totalorder %s422, %s424
      %p431 = scmp.eq.s32.totalorder %s33, 1
      %p432 = por %p430, %p431
      %p433 = scmp.ne.s32.totalorder %s424, %s425
      %p434 = scmp.eq.s32.totalorder %s33, 0
      %p435 = por %p433, %p434
      %p436 = scmp.ne.s32.totalorder %s424, %s425
      %p437 = scmp.eq.s32.totalorder %s34, 1
      %p438 = por %p436, %p437
      %p440 = scmp.ne.s32.totalorder %s425, %s439
      %p441 = scmp.eq.s32.totalorder %s34, 0
      %p442 = por %p440, %p441
      %s444 = sadd.s32 %s443, 1
      %p447 = scmp.eq.s32.totalorder %s28, 1
      %p448 = scmp.ne.s32.totalorder %s443, %s445
      %p449 = scmp.eq.s32.totalorder %s28, 0
      %p450 = por %p448, %p449
      %p451 = scmp.ne.s32.totalorder %s443, %s445
      %p452 = scmp.eq.s32.totalorder %s33, 1
      %p453 = por %p451, %p452
      %p454 = scmp.ne.s32.totalorder %s445, %s446
      %p455 = scmp.eq.s32.totalorder %s33, 0
      %p456 = por %p454, %p455
      %p457 = scmp.ne.s32.totalorder %s445, %s446
      %p458 = scmp.eq.s32.totalorder %s34, 1
      %p459 = por %p457, %p458
      %p461 = scmp.ne.s32.totalorder %s446, %s460
      %p462 = scmp.eq.s32.totalorder %s34, 0
      %p463 = por %p461, %p462
      %s464 = ssub.s32 %s35, %s47
      %s465 = ssub.s32 %s36, %s43
      %s466 = sor.u32 %s464, %s465
      %p467 = scmp.eq.s32.totalorder %s466, 0
      %s469 = sadd.s32 %s468, 1
      %s470 = scalar_select %p467, %s468, %s469
      %p473 = pneg %p467
      %p474 = scmp.eq.s32.totalorder %s28, 1
      %p475 = por %p473, %p474
      %p476 = scmp.ne.s32.totalorder %s468, %s471
      %p477 = scmp.eq.s32.totalorder %s28, 0
      %p478 = por %p476, %p477
      %p479 = scmp.ne.s32.totalorder %s468, %s471
      %p480 = scmp.eq.s32.totalorder %s33, 1
      %p481 = por %p479, %p480
      %p482 = scmp.ne.s32.totalorder %s471, %s472
      %p483 = scmp.eq.s32.totalorder %s33, 0
      %p484 = por %p482, %p483
      %p485 = scmp.ne.s32.totalorder %s471, %s472
      %p486 = scmp.eq.s32.totalorder %s34, 1
      %p487 = por %p485, %p486
      %p489 = scmp.ne.s32.totalorder %s472, %s488
      %p490 = scmp.eq.s32.totalorder %s34, 0
      %p491 = por %p489, %p490
      %p492 = scmp.le.s32.totalorder 1, %s28
      %p493 = scmp.lt.s32.totalorder %s28, 3
      %p494 = pnand %p492, %p493
      %p495 = pneg %p494
      // Predicated region
      $region9: #{tpu_custom_call.1} parent=5 // pred_check
        _
      $region10: #{tpu_custom_call.1} parent=5 // pred_check_branch
        %497 = sbr.rel (%p494) target = $region12
      $region11: #{tpu_custom_call.1} parent=5 // pred_region
        %s498 = ssub.s32 %s28, 1
        // Predicated region
        $region13: #{tpu_custom_call.1} parent=11 // pred_check
          %p499 = pneg %p141
        $region14: #{tpu_custom_call.1} parent=11 // pred_check_branch
          %501 = sbr.rel (%p499) target = $region16
        $region15: #{tpu_custom_call.1} parent=11 // pred_region
          _
        $region16: #{tpu_custom_call.1} parent=11 // pred_fallthru
          _
        // Predicated region
        $region17: #{tpu_custom_call.1} parent=11 // pred_check
          %p502 = pneg %p162
        $region18: #{tpu_custom_call.1} parent=11 // pred_check_branch
          %504 = sbr.rel (%p502) target = $region20
        $region19: #{tpu_custom_call.1} parent=11 // pred_region
          _
        $region20: #{tpu_custom_call.1} parent=11 // pred_fallthru
          _
        // Predicated region
        $region21: #{tpu_custom_call.1} parent=11 // pred_check
          %p505 = pneg %p183
        $region22: #{tpu_custom_call.1} parent=11 // pred_check_branch
          %507 = sbr.rel (%p505) target = $region24
        $region23: #{tpu_custom_call.1} parent=11 // pred_region
          _
        $region24: #{tpu_custom_call.1} parent=11 // pred_fallthru
          _
        // Predicated region
        $region25: #{tpu_custom_call.1} parent=11 // pred_check
          %p508 = pneg %p204
        $region26: #{tpu_custom_call.1} parent=11 // pred_check_branch
          %510 = sbr.rel (%p508) target = $region28
        $region27: #{tpu_custom_call.1} parent=11 // pred_region
          _
        $region28: #{tpu_custom_call.1} parent=11 // pred_fallthru
          _
        // Predicated region
        $region29: #{tpu_custom_call.1} parent=11 // pred_check
          %p511 = pneg %p225
        $region30: #{tpu_custom_call.1} parent=11 // pred_check_branch
          %513 = sbr.rel (%p511) target = $region32
        $region31: #{tpu_custom_call.1} parent=11 // pred_region
          _
        $region32: #{tpu_custom_call.1} parent=11 // pred_fallthru
          _
        // Predicated region
        $region33: #{tpu_custom_call.1} parent=11 // pred_check
          %p514 = pneg %p246
        $region34: #{tpu_custom_call.1} parent=11 // pred_check_branch
          %516 = sbr.rel (%p514) target = $region36
        $region35: #{tpu_custom_call.1} parent=11 // pred_region
          _
        $region36: #{tpu_custom_call.1} parent=11 // pred_fallthru
          _
        // Predicated region
        $region37: #{tpu_custom_call.1} parent=11 // pred_check
          %p517 = pneg %p267
        $region38: #{tpu_custom_call.1} parent=11 // pred_check_branch
          %519 = sbr.rel (%p517) target = $region40
        $region39: #{tpu_custom_call.1} parent=11 // pred_region
          _
        $region40: #{tpu_custom_call.1} parent=11 // pred_fallthru
          _
        // Predicated region
        $region41: #{tpu_custom_call.1} parent=11 // pred_check
          %p520 = pneg %p288
        $region42: #{tpu_custom_call.1} parent=11 // pred_check_branch
          %522 = sbr.rel (%p520) target = $region44
        $region43: #{tpu_custom_call.1} parent=11 // pred_region
          _
        $region44: #{tpu_custom_call.1} parent=11 // pred_fallthru
          _
        // Predicated region
        $region45: #{tpu_custom_call.1} parent=11 // pred_check
          %p523 = pneg %p309
        $region46: #{tpu_custom_call.1} parent=11 // pred_check_branch
          %525 = sbr.rel (%p523) target = $region48
        $region47: #{tpu_custom_call.1} parent=11 // pred_region
          _
        $region48: #{tpu_custom_call.1} parent=11 // pred_fallthru
          _
        // Predicated region
        $region49: #{tpu_custom_call.1} parent=11 // pred_check
          %p526 = pneg %p330
        $region50: #{tpu_custom_call.1} parent=11 // pred_check_branch
          %528 = sbr.rel (%p526) target = $region52
        $region51: #{tpu_custom_call.1} parent=11 // pred_region
          _
        $region52: #{tpu_custom_call.1} parent=11 // pred_fallthru
          _
        // Predicated region
        $region53: #{tpu_custom_call.1} parent=11 // pred_check
          %p529 = pneg %p351
        $region54: #{tpu_custom_call.1} parent=11 // pred_check_branch
          %531 = sbr.rel (%p529) target = $region56
        $region55: #{tpu_custom_call.1} parent=11 // pred_region
          _
        $region56: #{tpu_custom_call.1} parent=11 // pred_fallthru
          _
        // Predicated region
        $region57: #{tpu_custom_call.1} parent=11 // pred_check
          %p532 = pneg %p372
        $region58: #{tpu_custom_call.1} parent=11 // pred_check_branch
          %534 = sbr.rel (%p532) target = $region60
        $region59: #{tpu_custom_call.1} parent=11 // pred_region
          _
        $region60: #{tpu_custom_call.1} parent=11 // pred_fallthru
          _
        // Predicated region
        $region61: #{tpu_custom_call.1} parent=11 // pred_check
          %p535 = pneg %p393
        $region62: #{tpu_custom_call.1} parent=11 // pred_check_branch
          %537 = sbr.rel (%p535) target = $region64
        $region63: #{tpu_custom_call.1} parent=11 // pred_region
          _
        $region64: #{tpu_custom_call.1} parent=11 // pred_fallthru
          _
        // Predicated region
        $region65: #{tpu_custom_call.1} parent=11 // pred_check
          %p538 = pneg %p414
        $region66: #{tpu_custom_call.1} parent=11 // pred_check_branch
          %540 = sbr.rel (%p538) target = $region68
        $region67: #{tpu_custom_call.1} parent=11 // pred_region
          _
        $region68: #{tpu_custom_call.1} parent=11 // pred_fallthru
          _
        // Predicated region
        $region69: #{tpu_custom_call.1} parent=11 // pred_check
          %p541 = pneg %p435
        $region70: #{tpu_custom_call.1} parent=11 // pred_check_branch
          %543 = sbr.rel (%p541) target = $region72
        $region71: #{tpu_custom_call.1} parent=11 // pred_region
          _
        $region72: #{tpu_custom_call.1} parent=11 // pred_fallthru
          _
        // Predicated region
        $region73: #{tpu_custom_call.1} parent=11 // pred_check
          %p544 = pneg %p456
        $region74: #{tpu_custom_call.1} parent=11 // pred_check_branch
          %546 = sbr.rel (%p544) target = $region76
        $region75: #{tpu_custom_call.1} parent=11 // pred_region
          _
        $region76: #{tpu_custom_call.1} parent=11 // pred_fallthru
          _
      $region12: #{tpu_custom_call.1} parent=5 // pred_fallthru
        _
      %p547 = scmp.lt.s32.totalorder %s28, 2
      // Predicated region
      $region77: #{tpu_custom_call.1} parent=5 // pred_check
        %p548 = pneg %p547
      $region78: #{tpu_custom_call.1} parent=5 // pred_check_branch
        %550 = sbr.rel (%p548) target = $region80
      $region79: #{tpu_custom_call.1} parent=5 // pred_region
        // Predicated region
        $region81: #{tpu_custom_call.1} parent=79 // pred_check
          %p551 = pneg %p62
        $region82: #{tpu_custom_call.1} parent=79 // pred_check_branch
          %553 = sbr.rel (%p551) target = $region84
        $region83: #{tpu_custom_call.1} parent=79 // pred_region
          %p554 = scmp.lt.s32.totalorder %s35, 1
          %s555 = scalar_select %p554, %s35, 1
          %p556 = scmp.lt.s32.totalorder %s36, 0
          %s557 = scalar_select %p556, %s36, 0
          %s558 = sadd.s32 %s557, %s555
          %s559 = smul.addr %s558, 8
          %s560 = scalar_lea.vmem %s0, %s559
        $region84: #{tpu_custom_call.1} parent=79 // pred_fallthru
          _
        // Predicated region
        $region85: #{tpu_custom_call.1} parent=79 // pred_check
          %p561 = pneg %p88
        $region86: #{tpu_custom_call.1} parent=79 // pred_check_branch
          %563 = sbr.rel (%p561) target = $region88
        $region87: #{tpu_custom_call.1} parent=79 // pred_region
          %p564 = scmp.lt.s32.totalorder %s35, 1
          %s565 = scalar_select %p564, %s35, 1
          %s566 = smul.addr %s565, 8
          %s567 = scalar_lea.vmem %s1, %s566
        $region88: #{tpu_custom_call.1} parent=79 // pred_fallthru
          _
        // Predicated region
        $region89: #{tpu_custom_call.1} parent=79 // pred_check
          %p568 = pneg %p114
        $region90: #{tpu_custom_call.1} parent=79 // pred_check_branch
          %570 = sbr.rel (%p568) target = $region92
        $region91: #{tpu_custom_call.1} parent=79 // pred_region
          %p571 = scmp.lt.s32.totalorder %s35, 1
          %s572 = scalar_select %p571, %s35, 1
          %s573 = scalar_lea.vmem %s2, %s572
        $region92: #{tpu_custom_call.1} parent=79 // pred_fallthru
          _
      $region80: #{tpu_custom_call.1} parent=5 // pred_fallthru
        _
      %p574 = scmp.le.s32.totalorder 1, %s28
      %p575 = scmp.lt.s32.totalorder %s28, 3
      %p576 = pnand %p574, %p575
      %p577 = pneg %p576
      // Predicated region
      $region93: #{tpu_custom_call.1} parent=5 // pred_check
        _
      $region94: #{tpu_custom_call.1} parent=5 // pred_check_branch
        %579 = sbr.rel (%p576) target = $region96
      $region95: #{tpu_custom_call.1} parent=5 // pred_region
        %s580 = ssub.s32 %s28, 1
        %p581 = scmp.lt.s32.totalorder %s37, 1
        %s582 = scalar_select %p581, %s37, 1
        %p583 = scmp.lt.s32.totalorder %s38, 0
        %s584 = scalar_select %p583, %s38, 0
        %s585 = sadd.s32 %s584, %s582
        %s586 = smul.addr %s585, 8
        %s587 = scalar_lea.vmem %s0, %s586
        %p588 = pneg %p68
        %p589 = pneg %p65
        %p590 = scmp.lt.s32.totalorder %s37, 1
        %s591 = scalar_select %p590, %s37, 1
        %s592 = smul.addr %s591, 8
        %s593 = scalar_lea.vmem %s1, %s592
        %p594 = pneg %p94
        %p595 = pneg %p91
        %p596 = scmp.lt.s32.totalorder %s37, 1
        %s597 = scalar_select %p596, %s37, 1
        %s598 = scalar_lea.vmem %s2, %s597
        %p599 = pneg %p120
        %p600 = pneg %p117
        %p601 = pneg %p141
        %p602 = pneg %p138
        %p603 = pneg %p162
        %p604 = pneg %p159
        %p605 = pneg %p183
        %p606 = pneg %p180
        %p607 = pneg %p204
        %p608 = pneg %p201
        %p609 = pneg %p225
        %p610 = pneg %p222
        %p611 = pneg %p246
        %p612 = pneg %p243
        %p613 = pneg %p267
        %p614 = pneg %p264
        %p615 = pneg %p288
        %p616 = pneg %p285
        %p617 = pneg %p309
        %p618 = pneg %p306
        %p619 = pneg %p330
        %p620 = pneg %p327
        %p621 = pneg %p351
        %p622 = pneg %p348
        %p623 = pneg %p372
        %p624 = pneg %p369
        %p625 = pneg %p393
        %p626 = pneg %p390
        %p627 = pneg %p414
        %p628 = pneg %p411
        %p629 = pneg %p435
        %p630 = pneg %p432
        %p631 = pneg %p456
        %p632 = pneg %p453
        %p633 = pneg %p484
        %p634 = pneg %p481
        %s635 = sand.u32 %s471, 1
        %s636 = scalar_lea.sflag [#allocation3], %s635
        %s637 = sand.u32 %s471, 1
        %s638 = smul.addr %s637, 8
        %s639 = scalar_lea.vmem [#allocation2], %s638
        %p640 = scmp.lt.s32.totalorder %s37, 1
        %s641 = scalar_select %p640, %s37, 1
        %p642 = scmp.lt.s32.totalorder %s38, 0
        %s643 = scalar_select %p642, %s38, 0
        %s644 = sadd.s32 %s643, %s641
        %s645 = smul.addr %s644, 8
        %s646 = scalar_lea.vmem %s0, %s645
        %p647 = scmp.lt.s32.totalorder %s37, 1
        %s648 = scalar_select %p647, %s37, 1
        %s649 = smul.addr %s648, 8
        %s650 = scalar_lea.vmem %s1, %s649
        %p651 = scmp.lt.s32.totalorder %s37, 1
        %s652 = scalar_select %p651, %s37, 1
        %s653 = scalar_lea.vmem %s2, %s652
        %v655 = vld [vmem:[%s646] sm:$0xff]
        %v656 = vld [vmem:[%s650] sm:$0xff]
        %v657 = vld [vmem:[%s653] sm:$0x1]
        %v658 = vpack.c.bf16 %v655, %v655
        %v659 = vpack.c.bf16 %v656, %v656
        %v660 = vld [vmem:[%s3] sm:$0xf]
        %v661 = vld [vmem:[%s3 + $0x4] sm:$0xf]
        %v662 = vld [vmem:[%s3 + $0x8] sm:$0xf]
        %v663 = vld [vmem:[%s3 + $0xc] sm:$0xf]
        %v664 = vld [vmem:[%s3 + $0x10] sm:$0xf]
        %v665 = vld [vmem:[%s3 + $0x14] sm:$0xf]
        %v666 = vld [vmem:[%s3 + $0x18] sm:$0xf]
        %v667 = vld [vmem:[%s3 + $0x1c] sm:$0xf]
        %v668 = vld [vmem:[%s3 + $0x20] sm:$0xf]
        %v669 = vld [vmem:[%s3 + $0x24] sm:$0xf]
        %v670 = vld [vmem:[%s3 + $0x28] sm:$0xf]
        %v671 = vld [vmem:[%s3 + $0x2c] sm:$0xf]
        %v672 = vld [vmem:[%s3 + $0x30] sm:$0xf]
        %v673 = vld [vmem:[%s3 + $0x34] sm:$0xf]
        %v674 = vld [vmem:[%s3 + $0x38] sm:$0xf]
        %v675 = vld [vmem:[%s3 + $0x3c] sm:$0xf]
        %v676 = vld [vmem:[%s4] sm:$0x1]
        %v677 = vld [vmem:[%s4 + $0x1] sm:$0x1]
        %v678 = vld [vmem:[%s4 + $0x2] sm:$0x1]
        %v679 = vld [vmem:[%s4 + $0x3] sm:$0x1]
        %v684 = vlaneseq
        %v685 = vshrl.u32 %v684, 7
        %v686 = vsub.s32 0, %v685
        %v687 = vrot.slane %v676, %v686
        %v688 = vlaneseq
        %v689 = vshrl.u32 %v688, 7
        %v690 = vsub.s32 0, %v689
        %v691 = vrot.slane %v677, %v690
        %v692 = vlaneseq
        %v693 = vshrl.u32 %v692, 7
        %v694 = vsub.s32 0, %v693
        %v695 = vrot.slane %v678, %v694
        %v696 = vlaneseq
        %v697 = vshrl.u32 %v696, 7
        %v698 = vsub.s32 0, %v697
        %v699 = vrot.slane %v679, %v698
        %v708 = vunpack.c.l.b16 %v660
        %v709 = vunpack.c.l.b16 %v661
        %v710 = vunpack.c.l.b16 %v662
        %v711 = vunpack.c.l.b16 %v663
        %v712 = vpack.c.b16 %v709, %v708
        %v713 = vpack.c.b16 %v711, %v710
        %vm716 = vcmask 261120
        %v718 = vsel %vm716, %v658, 0
        %720 = vmatprep.subr.bf16.mxu0 0
        %721 = vmatpush1.bf16.msra.mxu0 %v712
        %722 = vmatprep.subr.bf16.mxu0 0
        %723 = vmatpush1.bf16.msra.mxu0 %v713
        %724 = vmatprep.subr.bf16.mxu0 0
        %725 = vmatpush1.bf16.msra.mxu0 0
        %726 = vmatprep.subr.bf16.mxu0 0
        %727 = vmatpush1.bf16.msra.mxu0 0
        %728 = vmatprep.subr.bf16.mxu0 0
        %729 = vmatpush1.bf16.msra.mxu0 0
        %730 = vmatprep.subr.bf16.mxu0 0
        %731 = vmatpush1.bf16.msra.mxu0 0
        %732 = vmatprep.subr.bf16.mxu0 0
        %733 = vmatpush1.bf16.msra.mxu0 0
        %734 = vmatprep.subr.bf16.mxu0 0
        %735 = vmatpush1.bf16.msra.mxu0 0
        %736 = vmatprep.subr.bf16.mxu0 0
        %737 = vmatpush1.bf16.msra.mxu0 0
        %738 = vmatprep.subr.bf16.mxu0 0
        %739 = vmatpush1.bf16.msra.mxu0 0
        %740 = vmatprep.subr.bf16.mxu0 0
        %741 = vmatpush1.bf16.msra.mxu0 0
        %742 = vmatprep.subr.bf16.mxu0 0
        %743 = vmatpush1.bf16.msra.mxu0 0
        %744 = vmatprep.subr.bf16.mxu0 0
        %745 = vmatpush1.bf16.msra.mxu0 0
        %746 = vmatprep.subr.bf16.mxu0 0
        %747 = vmatpush1.bf16.msra.mxu0 0
        %748 = vmatprep.subr.bf16.mxu0 0
        %749 = vmatpush1.bf16.msra.mxu0 0
        %750 = vmatprep.subr.bf16.mxu0 0
        %751 = vmatpush1.bf16.msra.mxu0 0
        %752 = vmatprep.mubr.bf16.mxu0 0
        %753 = vmatmul.mubr.bf16.gmra.mrb[0].mxu0 %v718
        %v754 = vpop.f32.mrb[0].mxu0
        %v755 = vadd.f32 %v687, %v754
        %v756 = vpop.f32.mrb[0].mxu0
        %v757 = vpop.f32.mrb[0].mxu0
        %v758 = vpop.f32.mrb[0].mxu0
        %759 = vdwg.mxu0
        %v764 = vunpack.c.l.b16 %v664
        %v765 = vunpack.c.l.b16 %v665
        %v766 = vunpack.c.l.b16 %v666
        %v767 = vunpack.c.l.b16 %v667
        %v768 = vpack.c.b16 %v765, %v764
        %v769 = vpack.c.b16 %v767, %v766
        %772 = vmatprep.subr.bf16.mxu0 0
        %773 = vmatpush1.bf16.msra.mxu0 %v768
        %774 = vmatprep.subr.bf16.mxu0 0
        %775 = vmatpush1.bf16.msra.mxu0 %v769
        %776 = vmatprep.subr.bf16.mxu0 0
        %777 = vmatpush1.bf16.msra.mxu0 0
        %778 = vmatprep.subr.bf16.mxu0 0
        %779 = vmatpush1.bf16.msra.mxu0 0
        %780 = vmatprep.subr.bf16.mxu0 0
        %781 = vmatpush1.bf16.msra.mxu0 0
        %782 = vmatprep.subr.bf16.mxu0 0
        %783 = vmatpush1.bf16.msra.mxu0 0
        %784 = vmatprep.subr.bf16.mxu0 0
        %785 = vmatpush1.bf16.msra.mxu0 0
        %786 = vmatprep.subr.bf16.mxu0 0
        %787 = vmatpush1.bf16.msra.mxu0 0
        %788 = vmatprep.subr.bf16.mxu0 0
        %789 = vmatpush1.bf16.msra.mxu0 0
        %790 = vmatprep.subr.bf16.mxu0 0
        %791 = vmatpush1.bf16.msra.mxu0 0
        %792 = vmatprep.subr.bf16.mxu0 0
        %793 = vmatpush1.bf16.msra.mxu0 0
        %794 = vmatprep.subr.bf16.mxu0 0
        %795 = vmatpush1.bf16.msra.mxu0 0
        %796 = vmatprep.subr.bf16.mxu0 0
        %797 = vmatpush1.bf16.msra.mxu0 0
        %798 = vmatprep.subr.bf16.mxu0 0
        %799 = vmatpush1.bf16.msra.mxu0 0
        %800 = vmatprep.subr.bf16.mxu0 0
        %801 = vmatpush1.bf16.msra.mxu0 0
        %802 = vmatprep.subr.bf16.mxu0 0
        %803 = vmatpush1.bf16.msra.mxu0 0
        %804 = vmatprep.mubr.bf16.mxu0 0
        %805 = vmatmul.mubr.bf16.gmra.mrb[0].mxu0 %v718
        %v806 = vpop.f32.mrb[0].mxu0
        %v807 = vadd.f32 %v691, %v806
        %v808 = vpop.f32.mrb[0].mxu0
        %v809 = vpop.f32.mrb[0].mxu0
        %v810 = vpop.f32.mrb[0].mxu0
        %811 = vdwg.mxu0
        %v816 = vunpack.c.l.b16 %v668
        %v817 = vunpack.c.l.b16 %v669
        %v818 = vunpack.c.l.b16 %v670
        %v819 = vunpack.c.l.b16 %v671
        %v820 = vpack.c.b16 %v817, %v816
        %v821 = vpack.c.b16 %v819, %v818
        %824 = vmatprep.subr.bf16.mxu0 0
        %825 = vmatpush1.bf16.msra.mxu0 %v820
        %826 = vmatprep.subr.bf16.mxu0 0
        %827 = vmatpush1.bf16.msra.mxu0 %v821
        %828 = vmatprep.subr.bf16.mxu0 0
        %829 = vmatpush1.bf16.msra.mxu0 0
        %830 = vmatprep.subr.bf16.mxu0 0
        %831 = vmatpush1.bf16.msra.mxu0 0
        %832 = vmatprep.subr.bf16.mxu0 0
        %833 = vmatpush1.bf16.msra.mxu0 0
        %834 = vmatprep.subr.bf16.mxu0 0
        %835 = vmatpush1.bf16.msra.mxu0 0
        %836 = vmatprep.subr.bf16.mxu0 0
        %837 = vmatpush1.bf16.msra.mxu0 0
        %838 = vmatprep.subr.bf16.mxu0 0
        %839 = vmatpush1.bf16.msra.mxu0 0
        %840 = vmatprep.subr.bf16.mxu0 0
        %841 = vmatpush1.bf16.msra.mxu0 0
        %842 = vmatprep.subr.bf16.mxu0 0
        %843 = vmatpush1.bf16.msra.mxu0 0
        %844 = vmatprep.subr.bf16.mxu0 0
        %845 = vmatpush1.bf16.msra.mxu0 0
        %846 = vmatprep.subr.bf16.mxu0 0
        %847 = vmatpush1.bf16.msra.mxu0 0
        %848 = vmatprep.subr.bf16.mxu0 0
        %849 = vmatpush1.bf16.msra.mxu0 0
        %850 = vmatprep.subr.bf16.mxu0 0
        %851 = vmatpush1.bf16.msra.mxu0 0
        %852 = vmatprep.subr.bf16.mxu0 0
        %853 = vmatpush1.bf16.msra.mxu0 0
        %854 = vmatprep.subr.bf16.mxu0 0
        %855 = vmatpush1.bf16.msra.mxu0 0
        %856 = vmatprep.mubr.bf16.mxu0 0
        %857 = vmatmul.mubr.bf16.gmra.mrb[0].mxu0 %v718
        %v858 = vpop.f32.mrb[0].mxu0
        %v859 = vadd.f32 %v695, %v858
        %v860 = vpop.f32.mrb[0].mxu0
        %v861 = vpop.f32.mrb[0].mxu0
        %v862 = vpop.f32.mrb[0].mxu0
        %863 = vdwg.mxu0
        %v868 = vunpack.c.l.b16 %v672
        %v869 = vunpack.c.l.b16 %v673
        %v870 = vunpack.c.l.b16 %v674
        %v871 = vunpack.c.l.b16 %v675
        %v872 = vpack.c.b16 %v869, %v868
        %v873 = vpack.c.b16 %v871, %v870
        %876 = vmatprep.subr.bf16.mxu0 0
        %877 = vmatpush1.bf16.msra.mxu0 %v872
        %878 = vmatprep.subr.bf16.mxu0 0
        %879 = vmatpush1.bf16.msra.mxu0 %v873
        %880 = vmatprep.subr.bf16.mxu0 0
        %881 = vmatpush1.bf16.msra.mxu0 0
        %882 = vmatprep.subr.bf16.mxu0 0
        %883 = vmatpush1.bf16.msra.mxu0 0
        %884 = vmatprep.subr.bf16.mxu0 0
        %885 = vmatpush1.bf16.msra.mxu0 0
        %886 = vmatprep.subr.bf16.mxu0 0
        %887 = vmatpush1.bf16.msra.mxu0 0
        %888 = vmatprep.subr.bf16.mxu0 0
        %889 = vmatpush1.bf16.msra.mxu0 0
        %890 = vmatprep.subr.bf16.mxu0 0
        %891 = vmatpush1.bf16.msra.mxu0 0
        %892 = vmatprep.subr.bf16.mxu0 0
        %893 = vmatpush1.bf16.msra.mxu0 0
        %894 = vmatprep.subr.bf16.mxu0 0
        %895 = vmatpush1.bf16.msra.mxu0 0
        %896 = vmatprep.subr.bf16.mxu0 0
        %897 = vmatpush1.bf16.msra.mxu0 0
        %898 = vmatprep.subr.bf16.mxu0 0
        %899 = vmatpush1.bf16.msra.mxu0 0
        %900 = vmatprep.subr.bf16.mxu0 0
        %901 = vmatpush1.bf16.msra.mxu0 0
        %902 = vmatprep.subr.bf16.mxu0 0
        %903 = vmatpush1.bf16.msra.mxu0 0
        %904 = vmatprep.subr.bf16.mxu0 0
        %905 = vmatpush1.bf16.msra.mxu0 0
        %906 = vmatprep.subr.bf16.mxu0 0
        %907 = vmatpush1.bf16.msra.mxu0 0
        %908 = vmatprep.mubr.bf16.mxu0 0
        %909 = vmatmul.mubr.bf16.gmra.mrb[0].mxu0 %v718
        %v910 = vpop.f32.mrb[0].mxu0
        %v911 = vadd.f32 %v699, %v910
        %v912 = vpop.f32.mrb[0].mxu0
        %v913 = vpop.f32.mrb[0].mxu0
        %v914 = vpop.f32.mrb[0].mxu0
        %915 = vdwg.mxu0
        %v916 = vld [vmem:[%s5] sm:$0xf]
        %v917 = vld [vmem:[%s5 + $0x4] sm:$0xf]
        %v918 = vld [vmem:[%s5 + $0x8] sm:$0xf]
        %v919 = vld [vmem:[%s5 + $0xc] sm:$0xf]
        %v920 = vld [vmem:[%s5 + $0x10] sm:$0xf]
        %v921 = vld [vmem:[%s5 + $0x14] sm:$0xf]
        %v922 = vld [vmem:[%s5 + $0x18] sm:$0xf]
        %v923 = vld [vmem:[%s5 + $0x1c] sm:$0xf]
        %v924 = vld [vmem:[%s5 + $0x20] sm:$0xf]
        %v925 = vld [vmem:[%s5 + $0x24] sm:$0xf]
        %v926 = vld [vmem:[%s5 + $0x28] sm:$0xf]
        %v927 = vld [vmem:[%s5 + $0x2c] sm:$0xf]
        %v928 = vld [vmem:[%s5 + $0x30] sm:$0xf]
        %v929 = vld [vmem:[%s5 + $0x34] sm:$0xf]
        %v930 = vld [vmem:[%s5 + $0x38] sm:$0xf]
        %v931 = vld [vmem:[%s5 + $0x3c] sm:$0xf]
        %v932 = vld [vmem:[%s6] sm:$0x1]
        %v933 = vld [vmem:[%s6 + $0x1] sm:$0x1]
        %v934 = vld [vmem:[%s6 + $0x2] sm:$0x1]
        %v935 = vld [vmem:[%s6 + $0x3] sm:$0x1]
        %v940 = vlaneseq
        %v941 = vshrl.u32 %v940, 7
        %v942 = vsub.s32 0, %v941
        %v943 = vrot.slane %v932, %v942
        %v944 = vlaneseq
        %v945 = vshrl.u32 %v944, 7
        %v946 = vsub.s32 0, %v945
        %v947 = vrot.slane %v933, %v946
        %v948 = vlaneseq
        %v949 = vshrl.u32 %v948, 7
        %v950 = vsub.s32 0, %v949
        %v951 = vrot.slane %v934, %v950
        %v952 = vlaneseq
        %v953 = vshrl.u32 %v952, 7
        %v954 = vsub.s32 0, %v953
        %v955 = vrot.slane %v935, %v954
        %v964 = vunpack.c.l.b16 %v916
        %v965 = vunpack.c.l.b16 %v917
        %v966 = vunpack.c.l.b16 %v918
        %v967 = vunpack.c.l.b16 %v919
        %v968 = vpack.c.b16 %v965, %v964
        %v969 = vpack.c.b16 %v967, %v966
        %v973 = vsel %vm716, %v659, 0
        %975 = vmatprep.subr.bf16.mxu0 0
        %976 = vmatpush1.bf16.msra.mxu0 %v968
        %977 = vmatprep.subr.bf16.mxu0 0
        %978 = vmatpush1.bf16.msra.mxu0 %v969
        %979 = vmatprep.subr.bf16.mxu0 0
        %980 = vmatpush1.bf16.msra.mxu0 0
        %981 = vmatprep.subr.bf16.mxu0 0
        %982 = vmatpush1.bf16.msra.mxu0 0
        %983 = vmatprep.subr.bf16.mxu0 0
        %984 = vmatpush1.bf16.msra.mxu0 0
        %985 = vmatprep.subr.bf16.mxu0 0
        %986 = vmatpush1.bf16.msra.mxu0 0
        %987 = vmatprep.subr.bf16.mxu0 0
        %988 = vmatpush1.bf16.msra.mxu0 0
        %989 = vmatprep.subr.bf16.mxu0 0
        %990 = vmatpush1.bf16.msra.mxu0 0
        %991 = vmatprep.subr.bf16.mxu0 0
        %992 = vmatpush1.bf16.msra.mxu0 0
        %993 = vmatprep.subr.bf16.mxu0 0
        %994 = vmatpush1.bf16.msra.mxu0 0
        %995 = vmatprep.subr.bf16.mxu0 0
        %996 = vmatpush1.bf16.msra.mxu0 0
        %997 = vmatprep.subr.bf16.mxu0 0
        %998 = vmatpush1.bf16.msra.mxu0 0
        %999 = vmatprep.subr.bf16.mxu0 0
        %1000 = vmatpush1.bf16.msra.mxu0 0
        %1001 = vmatprep.subr.bf16.mxu0 0
        %1002 = vmatpush1.bf16.msra.mxu0 0
        %1003 = vmatprep.subr.bf16.mxu0 0
        %1004 = vmatpush1.bf16.msra.mxu0 0
        %1005 = vmatprep.subr.bf16.mxu0 0
        %1006 = vmatpush1.bf16.msra.mxu0 0
        %1007 = vmatprep.mubr.bf16.mxu0 0
        %1008 = vmatmul.mubr.bf16.gmra.mrb[0].mxu0 %v973
        %v1009 = vpop.f32.mrb[0].mxu0
        %v1010 = vadd.f32 %v943, %v1009
        %v1011 = vpop.f32.mrb[0].mxu0
        %v1012 = vpop.f32.mrb[0].mxu0
        %v1013 = vpop.f32.mrb[0].mxu0
        %1014 = vdwg.mxu0
        %v1019 = vunpack.c.l.b16 %v920
        %v1020 = vunpack.c.l.b16 %v921
        %v1021 = vunpack.c.l.b16 %v922
        %v1022 = vunpack.c.l.b16 %v923
        %v1023 = vpack.c.b16 %v1020, %v1019
        %v1024 = vpack.c.b16 %v1022, %v1021
        %1027 = vmatprep.subr.bf16.mxu0 0
        %1028 = vmatpush1.bf16.msra.mxu0 %v1023
        %1029 = vmatprep.subr.bf16.mxu0 0
        %1030 = vmatpush1.bf16.msra.mxu0 %v1024
        %1031 = vmatprep.subr.bf16.mxu0 0
        %1032 = vmatpush1.bf16.msra.mxu0 0
        %1033 = vmatprep.subr.bf16.mxu0 0
        %1034 = vmatpush1.bf16.msra.mxu0 0
        %1035 = vmatprep.subr.bf16.mxu0 0
        %1036 = vmatpush1.bf16.msra.mxu0 0
        %1037 = vmatprep.subr.bf16.mxu0 0
        %1038 = vmatpush1.bf16.msra.mxu0 0
        %1039 = vmatprep.subr.bf16.mxu0 0
        %1040 = vmatpush1.bf16.msra.mxu0 0
        %1041 = vmatprep.subr.bf16.mxu0 0
        %1042 = vmatpush1.bf16.msra.mxu0 0
        %1043 = vmatprep.subr.bf16.mxu0 0
        %1044 = vmatpush1.bf16.msra.mxu0 0
        %1045 = vmatprep.subr.bf16.mxu0 0
        %1046 = vmatpush1.bf16.msra.mxu0 0
        %1047 = vmatprep.subr.bf16.mxu0 0
        %1048 = vmatpush1.bf16.msra.mxu0 0
        %1049 = vmatprep.subr.bf16.mxu0 0
        %1050 = vmatpush1.bf16.msra.mxu0 0
        %1051 = vmatprep.subr.bf16.mxu0 0
        %1052 = vmatpush1.bf16.msra.mxu0 0
        %1053 = vmatprep.subr.bf16.mxu0 0
        %1054 = vmatpush1.bf16.msra.mxu0 0
        %1055 = vmatprep.subr.bf16.mxu0 0
        %1056 = vmatpush1.bf16.msra.mxu0 0
        %1057 = vmatprep.subr.bf16.mxu0 0
        %1058 = vmatpush1.bf16.msra.mxu0 0
        %1059 = vmatprep.mubr.bf16.mxu0 0
        %1060 = vmatmul.mubr.bf16.gmra.mrb[0].mxu0 %v973
        %v1061 = vpop.f32.mrb[0].mxu0
        %v1062 = vadd.f32 %v947, %v1061
        %v1063 = vpop.f32.mrb[0].mxu0
        %v1064 = vpop.f32.mrb[0].mxu0
        %v1065 = vpop.f32.mrb[0].mxu0
        %1066 = vdwg.mxu0
        %v1071 = vunpack.c.l.b16 %v924
        %v1072 = vunpack.c.l.b16 %v925
        %v1073 = vunpack.c.l.b16 %v926
        %v1074 = vunpack.c.l.b16 %v927
        %v1075 = vpack.c.b16 %v1072, %v1071
        %v1076 = vpack.c.b16 %v1074, %v1073
        %1079 = vmatprep.subr.bf16.mxu0 0
        %1080 = vmatpush1.bf16.msra.mxu0 %v1075
        %1081 = vmatprep.subr.bf16.mxu0 0
        %1082 = vmatpush1.bf16.msra.mxu0 %v1076
        %1083 = vmatprep.subr.bf16.mxu0 0
        %1084 = vmatpush1.bf16.msra.mxu0 0
        %1085 = vmatprep.subr.bf16.mxu0 0
        %1086 = vmatpush1.bf16.msra.mxu0 0
        %1087 = vmatprep.subr.bf16.mxu0 0
        %1088 = vmatpush1.bf16.msra.mxu0 0
        %1089 = vmatprep.subr.bf16.mxu0 0
        %1090 = vmatpush1.bf16.msra.mxu0 0
        %1091 = vmatprep.subr.bf16.mxu0 0
        %1092 = vmatpush1.bf16.msra.mxu0 0
        %1093 = vmatprep.subr.bf16.mxu0 0
        %1094 = vmatpush1.bf16.msra.mxu0 0
        %1095 = vmatprep.subr.bf16.mxu0 0
        %1096 = vmatpush1.bf16.msra.mxu0 0
        %1097 = vmatprep.subr.bf16.mxu0 0
        %1098 = vmatpush1.bf16.msra.mxu0 0
        %1099 = vmatprep.subr.bf16.mxu0 0
        %1100 = vmatpush1.bf16.msra.mxu0 0
        %1101 = vmatprep.subr.bf16.mxu0 0
        %1102 = vmatpush1.bf16.msra.mxu0 0
        %1103 = vmatprep.subr.bf16.mxu0 0
        %1104 = vmatpush1.bf16.msra.mxu0 0
        %1105 = vmatprep.subr.bf16.mxu0 0
        %1106 = vmatpush1.bf16.msra.mxu0 0
        %1107 = vmatprep.subr.bf16.mxu0 0
        %1108 = vmatpush1.bf16.msra.mxu0 0
        %1109 = vmatprep.subr.bf16.mxu0 0
        %1110 = vmatpush1.bf16.msra.mxu0 0
        %1111 = vmatprep.mubr.bf16.mxu0 0
        %1112 = vmatmul.mubr.bf16.gmra.mrb[0].mxu0 %v973
        %v1113 = vpop.f32.mrb[0].mxu0
        %v1114 = vadd.f32 %v951, %v1113
        %v1115 = vpop.f32.mrb[0].mxu0
        %v1116 = vpop.f32.mrb[0].mxu0
        %v1117 = vpop.f32.mrb[0].mxu0
        %1118 = vdwg.mxu0
        %v1123 = vunpack.c.l.b16 %v928
        %v1124 = vunpack.c.l.b16 %v929
        %v1125 = vunpack.c.l.b16 %v930
        %v1126 = vunpack.c.l.b16 %v931
        %v1127 = vpack.c.b16 %v1124, %v1123
        %v1128 = vpack.c.b16 %v1126, %v1125
        %1131 = vmatprep.subr.bf16.mxu0 0
        %1132 = vmatpush1.bf16.msra.mxu0 %v1127
        %1133 = vmatprep.subr.bf16.mxu0 0
        %1134 = vmatpush1.bf16.msra.mxu0 %v1128
        %1135 = vmatprep.subr.bf16.mxu0 0
        %1136 = vmatpush1.bf16.msra.mxu0 0
        %1137 = vmatprep.subr.bf16.mxu0 0
        %1138 = vmatpush1.bf16.msra.mxu0 0
        %1139 = vmatprep.subr.bf16.mxu0 0
        %1140 = vmatpush1.bf16.msra.mxu0 0
        %1141 = vmatprep.subr.bf16.mxu0 0
        %1142 = vmatpush1.bf16.msra.mxu0 0
        %1143 = vmatprep.subr.bf16.mxu0 0
        %1144 = vmatpush1.bf16.msra.mxu0 0
        %1145 = vmatprep.subr.bf16.mxu0 0
        %1146 = vmatpush1.bf16.msra.mxu0 0
        %1147 = vmatprep.subr.bf16.mxu0 0
        %1148 = vmatpush1.bf16.msra.mxu0 0
        %1149 = vmatprep.subr.bf16.mxu0 0
        %1150 = vmatpush1.bf16.msra.mxu0 0
        %1151 = vmatprep.subr.bf16.mxu0 0
        %1152 = vmatpush1.bf16.msra.mxu0 0
        %1153 = vmatprep.subr.bf16.mxu0 0
        %1154 = vmatpush1.bf16.msra.mxu0 0
        %1155 = vmatprep.subr.bf16.mxu0 0
        %1156 = vmatpush1.bf16.msra.mxu0 0
        %1157 = vmatprep.subr.bf16.mxu0 0
        %1158 = vmatpush1.bf16.msra.mxu0 0
        %1159 = vmatprep.subr.bf16.mxu0 0
        %1160 = vmatpush1.bf16.msra.mxu0 0
        %1161 = vmatprep.subr.bf16.mxu0 0
        %1162 = vmatpush1.bf16.msra.mxu0 0
        %1163 = vmatprep.mubr.bf16.mxu0 0
        %1164 = vmatmul.mubr.bf16.gmra.mrb[0].mxu0 %v973
        %v1165 = vpop.f32.mrb[0].mxu0
        %v1166 = vadd.f32 %v955, %v1165
        %v1167 = vpop.f32.mrb[0].mxu0
        %v1168 = vpop.f32.mrb[0].mxu0
        %v1169 = vpop.f32.mrb[0].mxu0
        %1170 = vdwg.mxu0
        %v1171 = vld [vmem:[%s7] sm:$0xf]
        %v1172 = vld [vmem:[%s7 + $0x4] sm:$0xf]
        %v1173 = vld [vmem:[%s7 + $0x8] sm:$0xf]
        %v1174 = vld [vmem:[%s7 + $0xc] sm:$0xf]
        %v1175 = vld [vmem:[%s7 + $0x10] sm:$0xf]
        %v1176 = vld [vmem:[%s7 + $0x14] sm:$0xf]
        %v1177 = vld [vmem:[%s7 + $0x18] sm:$0xf]
        %v1178 = vld [vmem:[%s7 + $0x1c] sm:$0xf]
        %v1179 = vld [vmem:[%s7 + $0x20] sm:$0xf]
        %v1180 = vld [vmem:[%s7 + $0x24] sm:$0xf]
        %v1181 = vld [vmem:[%s7 + $0x28] sm:$0xf]
        %v1182 = vld [vmem:[%s7 + $0x2c] sm:$0xf]
        %v1183 = vld [vmem:[%s7 + $0x30] sm:$0xf]
        %v1184 = vld [vmem:[%s7 + $0x34] sm:$0xf]
        %v1185 = vld [vmem:[%s7 + $0x38] sm:$0xf]
        %v1186 = vld [vmem:[%s7 + $0x3c] sm:$0xf]
        %v1187 = vld [vmem:[%s8] sm:$0x1]
        %v1188 = vld [vmem:[%s8 + $0x1] sm:$0x1]
        %v1189 = vld [vmem:[%s8 + $0x2] sm:$0x1]
        %v1190 = vld [vmem:[%s8 + $0x3] sm:$0x1]
        %v1195 = vlaneseq
        %v1196 = vshrl.u32 %v1195, 7
        %v1197 = vsub.s32 0, %v1196
        %v1198 = vrot.slane %v1187, %v1197
        %v1199 = vlaneseq
        %v1200 = vshrl.u32 %v1199, 7
        %v1201 = vsub.s32 0, %v1200
        %v1202 = vrot.slane %v1188, %v1201
        %v1203 = vlaneseq
        %v1204 = vshrl.u32 %v1203, 7
        %v1205 = vsub.s32 0, %v1204
        %v1206 = vrot.slane %v1189, %v1205
        %v1207 = vlaneseq
        %v1208 = vshrl.u32 %v1207, 7
        %v1209 = vsub.s32 0, %v1208
        %v1210 = vrot.slane %v1190, %v1209
        %v1219 = vunpack.c.l.b16 %v1171
        %v1220 = vunpack.c.l.b16 %v1172
        %v1221 = vunpack.c.l.b16 %v1173
        %v1222 = vunpack.c.l.b16 %v1174
        %v1223 = vpack.c.b16 %v1220, %v1219
        %v1224 = vpack.c.b16 %v1222, %v1221
        %1227 = vmatprep.subr.bf16.mxu0 0
        %1228 = vmatpush1.bf16.msra.mxu0 %v1223
        %1229 = vmatprep.subr.bf16.mxu0 0
        %1230 = vmatpush1.bf16.msra.mxu0 %v1224
        %1231 = vmatprep.subr.bf16.mxu0 0
        %1232 = vmatpush1.bf16.msra.mxu0 0
        %1233 = vmatprep.subr.bf16.mxu0 0
        %1234 = vmatpush1.bf16.msra.mxu0 0
        %1235 = vmatprep.subr.bf16.mxu0 0
        %1236 = vmatpush1.bf16.msra.mxu0 0
        %1237 = vmatprep.subr.bf16.mxu0 0
        %1238 = vmatpush1.bf16.msra.mxu0 0
        %1239 = vmatprep.subr.bf16.mxu0 0
        %1240 = vmatpush1.bf16.msra.mxu0 0
        %1241 = vmatprep.subr.bf16.mxu0 0
        %1242 = vmatpush1.bf16.msra.mxu0 0
        %1243 = vmatprep.subr.bf16.mxu0 0
        %1244 = vmatpush1.bf16.msra.mxu0 0
        %1245 = vmatprep.subr.bf16.mxu0 0
        %1246 = vmatpush1.bf16.msra.mxu0 0
        %1247 = vmatprep.subr.bf16.mxu0 0
        %1248 = vmatpush1.bf16.msra.mxu0 0
        %1249 = vmatprep.subr.bf16.mxu0 0
        %1250 = vmatpush1.bf16.msra.mxu0 0
        %1251 = vmatprep.subr.bf16.mxu0 0
        %1252 = vmatpush1.bf16.msra.mxu0 0
        %1253 = vmatprep.subr.bf16.mxu0 0
        %1254 = vmatpush1.bf16.msra.mxu0 0
        %1255 = vmatprep.subr.bf16.mxu0 0
        %1256 = vmatpush1.bf16.msra.mxu0 0
        %1257 = vmatprep.subr.bf16.mxu0 0
        %1258 = vmatpush1.bf16.msra.mxu0 0
        %1259 = vmatprep.mubr.bf16.mxu0 0
        %1260 = vmatmul.mubr.bf16.gmra.mrb[0].mxu0 %v973
        %v1261 = vpop.f32.mrb[0].mxu0
        %v1262 = vadd.f32 %v1198, %v1261
        %v1263 = vpop.f32.mrb[0].mxu0
        %v1264 = vpop.f32.mrb[0].mxu0
        %v1265 = vpop.f32.mrb[0].mxu0
        %1266 = vdwg.mxu0
        %v1271 = vunpack.c.l.b16 %v1175
        %v1272 = vunpack.c.l.b16 %v1176
        %v1273 = vunpack.c.l.b16 %v1177
        %v1274 = vunpack.c.l.b16 %v1178
        %v1275 = vpack.c.b16 %v1272, %v1271
        %v1276 = vpack.c.b16 %v1274, %v1273
        %1279 = vmatprep.subr.bf16.mxu0 0
        %1280 = vmatpush1.bf16.msra.mxu0 %v1275
        %1281 = vmatprep.subr.bf16.mxu0 0
        %1282 = vmatpush1.bf16.msra.mxu0 %v1276
        %1283 = vmatprep.subr.bf16.mxu0 0
        %1284 = vmatpush1.bf16.msra.mxu0 0
        %1285 = vmatprep.subr.bf16.mxu0 0
        %1286 = vmatpush1.bf16.msra.mxu0 0
        %1287 = vmatprep.subr.bf16.mxu0 0
        %1288 = vmatpush1.bf16.msra.mxu0 0
        %1289 = vmatprep.subr.bf16.mxu0 0
        %1290 = vmatpush1.bf16.msra.mxu0 0
        %1291 = vmatprep.subr.bf16.mxu0 0
        %1292 = vmatpush1.bf16.msra.mxu0 0
        %1293 = vmatprep.subr.bf16.mxu0 0
        %1294 = vmatpush1.bf16.msra.mxu0 0
        %1295 = vmatprep.subr.bf16.mxu0 0
        %1296 = vmatpush1.bf16.msra.mxu0 0
        %1297 = vmatprep.subr.bf16.mxu0 0
        %1298 = vmatpush1.bf16.msra.mxu0 0
        %1299 = vmatprep.subr.bf16.mxu0 0
        %1300 = vmatpush1.bf16.msra.mxu0 0
        %1301 = vmatprep.subr.bf16.mxu0 0
        %1302 = vmatpush1.bf16.msra.mxu0 0
        %1303 = vmatprep.subr.bf16.mxu0 0
        %1304 = vmatpush1.bf16.msra.mxu0 0
        %1305 = vmatprep.subr.bf16.mxu0 0
        %1306 = vmatpush1.bf16.msra.mxu0 0
        %1307 = vmatprep.subr.bf16.mxu0 0
        %1308 = vmatpush1.bf16.msra.mxu0 0
        %1309 = vmatprep.subr.bf16.mxu0 0
        %1310 = vmatpush1.bf16.msra.mxu0 0
        %1311 = vmatprep.mubr.bf16.mxu0 0
        %1312 = vmatmul.mubr.bf16.gmra.mrb[0].mxu0 %v973
        %v1313 = vpop.f32.mrb[0].mxu0
        %v1314 = vadd.f32 %v1202, %v1313
        %v1315 = vpop.f32.mrb[0].mxu0
        %v1316 = vpop.f32.mrb[0].mxu0
        %v1317 = vpop.f32.mrb[0].mxu0
        %1318 = vdwg.mxu0
        %v1323 = vunpack.c.l.b16 %v1179
        %v1324 = vunpack.c.l.b16 %v1180
        %v1325 = vunpack.c.l.b16 %v1181
        %v1326 = vunpack.c.l.b16 %v1182
        %v1327 = vpack.c.b16 %v1324, %v1323
        %v1328 = vpack.c.b16 %v1326, %v1325
        %1331 = vmatprep.subr.bf16.mxu0 0
        %1332 = vmatpush1.bf16.msra.mxu0 %v1327
        %1333 = vmatprep.subr.bf16.mxu0 0
        %1334 = vmatpush1.bf16.msra.mxu0 %v1328
        %1335 = vmatprep.subr.bf16.mxu0 0
        %1336 = vmatpush1.bf16.msra.mxu0 0
        %1337 = vmatprep.subr.bf16.mxu0 0
        %1338 = vmatpush1.bf16.msra.mxu0 0
        %1339 = vmatprep.subr.bf16.mxu0 0
        %1340 = vmatpush1.bf16.msra.mxu0 0
        %1341 = vmatprep.subr.bf16.mxu0 0
        %1342 = vmatpush1.bf16.msra.mxu0 0
        %1343 = vmatprep.subr.bf16.mxu0 0
        %1344 = vmatpush1.bf16.msra.mxu0 0
        %1345 = vmatprep.subr.bf16.mxu0 0
        %1346 = vmatpush1.bf16.msra.mxu0 0
        %1347 = vmatprep.subr.bf16.mxu0 0
        %1348 = vmatpush1.bf16.msra.mxu0 0
        %1349 = vmatprep.subr.bf16.mxu0 0
        %1350 = vmatpush1.bf16.msra.mxu0 0
        %1351 = vmatprep.subr.bf16.mxu0 0
        %1352 = vmatpush1.bf16.msra.mxu0 0
        %1353 = vmatprep.subr.bf16.mxu0 0
        %1354 = vmatpush1.bf16.msra.mxu0 0
        %1355 = vmatprep.subr.bf16.mxu0 0
        %1356 = vmatpush1.bf16.msra.mxu0 0
        %1357 = vmatprep.subr.bf16.mxu0 0
        %1358 = vmatpush1.bf16.msra.mxu0 0
        %1359 = vmatprep.subr.bf16.mxu0 0
        %1360 = vmatpush1.bf16.msra.mxu0 0
        %1361 = vmatprep.subr.bf16.mxu0 0
        %1362 = vmatpush1.bf16.msra.mxu0 0
        %1363 = vmatprep.mubr.bf16.mxu0 0
        %1364 = vmatmul.mubr.bf16.gmra.mrb[0].mxu0 %v973
        %v1365 = vpop.f32.mrb[0].mxu0
        %v1366 = vadd.f32 %v1206, %v1365
        %v1367 = vpop.f32.mrb[0].mxu0
        %v1368 = vpop.f32.mrb[0].mxu0
        %v1369 = vpop.f32.mrb[0].mxu0
        %1370 = vdwg.mxu0
        %v1375 = vunpack.c.l.b16 %v1183
        %v1376 = vunpack.c.l.b16 %v1184
        %v1377 = vunpack.c.l.b16 %v1185
        %v1378 = vunpack.c.l.b16 %v1186
        %v1379 = vpack.c.b16 %v1376, %v1375
        %v1380 = vpack.c.b16 %v1378, %v1377
        %1383 = vmatprep.subr.bf16.mxu0 0
        %1384 = vmatpush1.bf16.msra.mxu0 %v1379
        %1385 = vmatprep.subr.bf16.mxu0 0
        %1386 = vmatpush1.bf16.msra.mxu0 %v1380
        %1387 = vmatprep.subr.bf16.mxu0 0
        %1388 = vmatpush1.bf16.msra.mxu0 0
        %1389 = vmatprep.subr.bf16.mxu0 0
        %1390 = vmatpush1.bf16.msra.mxu0 0
        %1391 = vmatprep.subr.bf16.mxu0 0
        %1392 = vmatpush1.bf16.msra.mxu0 0
        %1393 = vmatprep.subr.bf16.mxu0 0
        %1394 = vmatpush1.bf16.msra.mxu0 0
        %1395 = vmatprep.subr.bf16.mxu0 0
        %1396 = vmatpush1.bf16.msra.mxu0 0
        %1397 = vmatprep.subr.bf16.mxu0 0
        %1398 = vmatpush1.bf16.msra.mxu0 0
        %1399 = vmatprep.subr.bf16.mxu0 0
        %1400 = vmatpush1.bf16.msra.mxu0 0
        %1401 = vmatprep.subr.bf16.mxu0 0
        %1402 = vmatpush1.bf16.msra.mxu0 0
        %1403 = vmatprep.subr.bf16.mxu0 0
        %1404 = vmatpush1.bf16.msra.mxu0 0
        %1405 = vmatprep.subr.bf16.mxu0 0
        %1406 = vmatpush1.bf16.msra.mxu0 0
        %1407 = vmatprep.subr.bf16.mxu0 0
        %1408 = vmatpush1.bf16.msra.mxu0 0
        %1409 = vmatprep.subr.bf16.mxu0 0
        %1410 = vmatpush1.bf16.msra.mxu0 0
        %1411 = vmatprep.subr.bf16.mxu0 0
        %1412 = vmatpush1.bf16.msra.mxu0 0
        %1413 = vmatprep.subr.bf16.mxu0 0
        %1414 = vmatpush1.bf16.msra.mxu0 0
        %1415 = vmatprep.mubr.bf16.mxu0 0
        %1416 = vmatmul.mubr.bf16.gmra.mrb[0].mxu0 %v973
        %v1417 = vpop.f32.mrb[0].mxu0
        %v1418 = vadd.f32 %v1210, %v1417
        %v1419 = vpop.f32.mrb[0].mxu0
        %v1420 = vpop.f32.mrb[0].mxu0
        %v1421 = vpop.f32.mrb[0].mxu0
        %1422 = vdwg.mxu0
        %v1423 = vpack.c.bf16 %v755, %v755
        %v1424 = vpack.c.bf16 %v807, %v807
        %v1425 = vpack.c.bf16 %v859, %v859
        %v1426 = vpack.c.bf16 %v911, %v911
        %v1427 = vpack.c.bf16 %v1010, %v1010
        %v1428 = vpack.c.bf16 %v1062, %v1062
        %v1429 = vpack.c.bf16 %v1114, %v1114
        %v1430 = vpack.c.bf16 %v1166, %v1166
        %vm1431 = vcmask 64512
        %v1433 = vsel %vm1431, %v1423, 0
        %v1436 = vsel %vm1431, %v1427, 0
        %1438 = vmatprep.subr.bf16.mxu0 0
        %1439 = vmatpush1.bf16.xpose.msra.mxu0 %v1436
        %1440 = vmatprep.subr.bf16.mxu0 0
        %1441 = vmatpush1.bf16.xpose.msra.mxu0 0
        %1442 = vmatprep.subr.bf16.mxu0 0
        %1443 = vmatpush1.bf16.xpose.msra.mxu0 0
        %1444 = vmatprep.subr.bf16.mxu0 0
        %1445 = vmatpush1.bf16.xpose.msra.mxu0 0
        %1446 = vmatprep.subr.bf16.mxu0 0
        %1447 = vmatpush1.bf16.xpose.msra.mxu0 0
        %1448 = vmatprep.subr.bf16.mxu0 0
        %1449 = vmatpush1.bf16.xpose.msra.mxu0 0
        %1450 = vmatprep.subr.bf16.mxu0 0
        %1451 = vmatpush1.bf16.xpose.msra.mxu0 0
        %1452 = vmatprep.subr.bf16.mxu0 0
        %1453 = vmatpush1.bf16.xpose.msra.mxu0 0
        %1454 = vmatprep.subr.bf16.mxu0 0
        %1455 = vmatpush1.bf16.xpose.msra.mxu0 0
        %1456 = vmatprep.subr.bf16.mxu0 0
        %1457 = vmatpush1.bf16.xpose.msra.mxu0 0
        %1458 = vmatprep.subr.bf16.mxu0 0
        %1459 = vmatpush1.bf16.xpose.msra.mxu0 0
        %1460 = vmatprep.subr.bf16.mxu0 0
        %1461 = vmatpush1.bf16.xpose.msra.mxu0 0
        %1462 = vmatprep.subr.bf16.mxu0 0
        %1463 = vmatpush1.bf16.xpose.msra.mxu0 0
        %1464 = vmatprep.subr.bf16.mxu0 0
        %1465 = vmatpush1.bf16.xpose.msra.mxu0 0
        %1466 = vmatprep.subr.bf16.mxu0 0
        %1467 = vmatpush1.bf16.xpose.msra.mxu0 0
        %1468 = vmatprep.subr.bf16.mxu0 0
        %1469 = vmatpush1.bf16.xpose.msra.mxu0 0
        %1470 = vmatprep.mubr.bf16.mxu0 0
        %1471 = vmatmul.mubr.bf16.gmra.mrb[0].mxu0 %v1433
        %v1472 = vpop.f32.mrb[0].mxu0
        %v1473 = vadd.f32 0.0, %v1472
        %v1474 = vpop.f32.mrb[0].mxu0
        %v1475 = vpop.f32.mrb[0].mxu0
        %v1476 = vpop.f32.mrb[0].mxu0
        %1477 = vdwg.mxu0
        %v1479 = vsel %vm1431, %v1424, 0
        %v1482 = vsel %vm1431, %v1428, 0
        %1484 = vmatprep.subr.bf16.mxu0 0
        %1485 = vmatpush1.bf16.xpose.msra.mxu0 %v1482
        %1486 = vmatprep.subr.bf16.mxu0 0
        %1487 = vmatpush1.bf16.xpose.msra.mxu0 0
        %1488 = vmatprep.subr.bf16.mxu0 0
        %1489 = vmatpush1.bf16.xpose.msra.mxu0 0
        %1490 = vmatprep.subr.bf16.mxu0 0
        %1491 = vmatpush1.bf16.xpose.msra.mxu0 0
        %1492 = vmatprep.subr.bf16.mxu0 0
        %1493 = vmatpush1.bf16.xpose.msra.mxu0 0
        %1494 = vmatprep.subr.bf16.mxu0 0
        %1495 = vmatpush1.bf16.xpose.msra.mxu0 0
        %1496 = vmatprep.subr.bf16.mxu0 0
        %1497 = vmatpush1.bf16.xpose.msra.mxu0 0
        %1498 = vmatprep.subr.bf16.mxu0 0
        %1499 = vmatpush1.bf16.xpose.msra.mxu0 0
        %1500 = vmatprep.subr.bf16.mxu0 0
        %1501 = vmatpush1.bf16.xpose.msra.mxu0 0
        %1502 = vmatprep.subr.bf16.mxu0 0
        %1503 = vmatpush1.bf16.xpose.msra.mxu0 0
        %1504 = vmatprep.subr.bf16.mxu0 0
        %1505 = vmatpush1.bf16.xpose.msra.mxu0 0
        %1506 = vmatprep.subr.bf16.mxu0 0
        %1507 = vmatpush1.bf16.xpose.msra.mxu0 0
        %1508 = vmatprep.subr.bf16.mxu0 0
        %1509 = vmatpush1.bf16.xpose.msra.mxu0 0
        %1510 = vmatprep.subr.bf16.mxu0 0
        %1511 = vmatpush1.bf16.xpose.msra.mxu0 0
        %1512 = vmatprep.subr.bf16.mxu0 0
        %1513 = vmatpush1.bf16.xpose.msra.mxu0 0
        %1514 = vmatprep.subr.bf16.mxu0 0
        %1515 = vmatpush1.bf16.xpose.msra.mxu0 0
        %1516 = vmatprep.mubr.bf16.mxu0 0
        %1517 = vmatmul.mubr.bf16.gmra.mrb[0].mxu0 %v1479
        %v1518 = vpop.f32.mrb[0].mxu0
        %v1519 = vadd.f32 0.0, %v1518
        %v1520 = vpop.f32.mrb[0].mxu0
        %v1521 = vpop.f32.mrb[0].mxu0
        %v1522 = vpop.f32.mrb[0].mxu0
        %1523 = vdwg.mxu0
        %v1525 = vsel %vm1431, %v1425, 0
        %v1528 = vsel %vm1431, %v1429, 0
        %1530 = vmatprep.subr.bf16.mxu0 0
        %1531 = vmatpush1.bf16.xpose.msra.mxu0 %v1528
        %1532 = vmatprep.subr.bf16.mxu0 0
        %1533 = vmatpush1.bf16.xpose.msra.mxu0 0
        %1534 = vmatprep.subr.bf16.mxu0 0
        %1535 = vmatpush1.bf16.xpose.msra.mxu0 0
        %1536 = vmatprep.subr.bf16.mxu0 0
        %1537 = vmatpush1.bf16.xpose.msra.mxu0 0
        %1538 = vmatprep.subr.bf16.mxu0 0
        %1539 = vmatpush1.bf16.xpose.msra.mxu0 0
        %1540 = vmatprep.subr.bf16.mxu0 0
        %1541 = vmatpush1.bf16.xpose.msra.mxu0 0
        %1542 = vmatprep.subr.bf16.mxu0 0
        %1543 = vmatpush1.bf16.xpose.msra.mxu0 0
        %1544 = vmatprep.subr.bf16.mxu0 0
        %1545 = vmatpush1.bf16.xpose.msra.mxu0 0
        %1546 = vmatprep.subr.bf16.mxu0 0
        %1547 = vmatpush1.bf16.xpose.msra.mxu0 0
        %1548 = vmatprep.subr.bf16.mxu0 0
        %1549 = vmatpush1.bf16.xpose.msra.mxu0 0
        %1550 = vmatprep.subr.bf16.mxu0 0
        %1551 = vmatpush1.bf16.xpose.msra.mxu0 0
        %1552 = vmatprep.subr.bf16.mxu0 0
        %1553 = vmatpush1.bf16.xpose.msra.mxu0 0
        %1554 = vmatprep.subr.bf16.mxu0 0
        %1555 = vmatpush1.bf16.xpose.msra.mxu0 0
        %1556 = vmatprep.subr.bf16.mxu0 0
        %1557 = vmatpush1.bf16.xpose.msra.mxu0 0
        %1558 = vmatprep.subr.bf16.mxu0 0
        %1559 = vmatpush1.bf16.xpose.msra.mxu0 0
        %1560 = vmatprep.subr.bf16.mxu0 0
        %1561 = vmatpush1.bf16.xpose.msra.mxu0 0
        %1562 = vmatprep.mubr.bf16.mxu0 0
        %1563 = vmatmul.mubr.bf16.gmra.mrb[0].mxu0 %v1525
        %v1564 = vpop.f32.mrb[0].mxu0
        %v1565 = vadd.f32 0.0, %v1564
        %v1566 = vpop.f32.mrb[0].mxu0
        %v1567 = vpop.f32.mrb[0].mxu0
        %v1568 = vpop.f32.mrb[0].mxu0
        %1569 = vdwg.mxu0
        %v1571 = vsel %vm1431, %v1426, 0
        %v1574 = vsel %vm1431, %v1430, 0
        %1576 = vmatprep.subr.bf16.mxu0 0
        %1577 = vmatpush1.bf16.xpose.msra.mxu0 %v1574
        %1578 = vmatprep.subr.bf16.mxu0 0
        %1579 = vmatpush1.bf16.xpose.msra.mxu0 0
        %1580 = vmatprep.subr.bf16.mxu0 0
        %1581 = vmatpush1.bf16.xpose.msra.mxu0 0
        %1582 = vmatprep.subr.bf16.mxu0 0
        %1583 = vmatpush1.bf16.xpose.msra.mxu0 0
        %1584 = vmatprep.subr.bf16.mxu0 0
        %1585 = vmatpush1.bf16.xpose.msra.mxu0 0
        %1586 = vmatprep.subr.bf16.mxu0 0
        %1587 = vmatpush1.bf16.xpose.msra.mxu0 0
        %1588 = vmatprep.subr.bf16.mxu0 0
        %1589 = vmatpush1.bf16.xpose.msra.mxu0 0
        %1590 = vmatprep.subr.bf16.mxu0 0
        %1591 = vmatpush1.bf16.xpose.msra.mxu0 0
        %1592 = vmatprep.subr.bf16.mxu0 0
        %1593 = vmatpush1.bf16.xpose.msra.mxu0 0
        %1594 = vmatprep.subr.bf16.mxu0 0
        %1595 = vmatpush1.bf16.xpose.msra.mxu0 0
        %1596 = vmatprep.subr.bf16.mxu0 0
        %1597 = vmatpush1.bf16.xpose.msra.mxu0 0
        %1598 = vmatprep.subr.bf16.mxu0 0
        %1599 = vmatpush1.bf16.xpose.msra.mxu0 0
        %1600 = vmatprep.subr.bf16.mxu0 0
        %1601 = vmatpush1.bf16.xpose.msra.mxu0 0
        %1602 = vmatprep.subr.bf16.mxu0 0
        %1603 = vmatpush1.bf16.xpose.msra.mxu0 0
        %1604 = vmatprep.subr.bf16.mxu0 0
        %1605 = vmatpush1.bf16.xpose.msra.mxu0 0
        %1606 = vmatprep.subr.bf16.mxu0 0
        %1607 = vmatpush1.bf16.xpose.msra.mxu0 0
        %1608 = vmatprep.mubr.bf16.mxu0 0
        %1609 = vmatmul.mubr.bf16.gmra.mrb[0].mxu0 %v1571
        %v1610 = vpop.f32.mrb[0].mxu0
        %v1611 = vadd.f32 0.0, %v1610
        %v1612 = vpop.f32.mrb[0].mxu0
        %v1613 = vpop.f32.mrb[0].mxu0
        %v1614 = vpop.f32.mrb[0].mxu0
        %1615 = vdwg.mxu0
        %v1616 = vmul.f32 %v1473, 0.35355338
        %v1617 = vmul.f32 %v1519, 0.35355338
        %v1618 = vmul.f32 %v1565, 0.35355338
        %v1619 = vmul.f32 %v1611, 0.35355338
        %v1621 = vlaneseq
        %v1622 = vshrl.u32 %v1621, 7
        %v1623 = vsub.s32 0, %v1622
        %v1624 = vrot.slane %v657, %v1623
        %v1626 = vadd.f32 %v1616, %v1624
        %v1627 = vadd.f32 %v1617, %v1624
        %v1628 = vadd.f32 %v1618, %v1624
        %v1629 = vadd.f32 %v1619, %v1624
        %v1630 = vsel %vm1431, %v1626, -inf
        %1631 = vmax.xlane.f32.xlu0 %v1630
        %v1632 = vpop.xlane.xlu0 %1631
        %v1633 = vsel %vm1431, %v1627, -inf
        %1634 = vmax.xlane.f32.xlu0 %v1633
        %v1635 = vpop.xlane.xlu0 %1634
        %v1636 = vsel %vm1431, %v1628, -inf
        %1637 = vmax.xlane.f32.xlu0 %v1636
        %v1638 = vpop.xlane.xlu0 %1637
        %v1639 = vsel %vm1431, %v1629, -inf
        %1640 = vmax.xlane.f32.xlu0 %v1639
        %v1641 = vpop.xlane.xlu0 %1640
        %v1642 = vsub.f32 %v1626, %v1632
        %v1643 = vsub.f32 %v1627, %v1635
        %v1644 = vsub.f32 %v1628, %v1638
        %v1645 = vsub.f32 %v1629, %v1641
        %v1646 = vmul.f32 %v1642, 1.442695
        %v1647 = vpow.pop %v1646
        %v1648 = vmul.f32 %v1643, 1.442695
        %v1649 = vpow.pop %v1648
        %v1650 = vmul.f32 %v1644, 1.442695
        %v1651 = vpow.pop %v1650
        %v1652 = vmul.f32 %v1645, 1.442695
        %v1653 = vpow.pop %v1652
        %v1654 = vsel %vm1431, %v1647, 0.0
        %1655 = vadd.xlane.f32.xlu0 %v1654
        %v1656 = vpop.xlane.xlu0 %1655
        %v1657 = vsel %vm1431, %v1649, 0.0
        %1658 = vadd.xlane.f32.xlu0 %v1657
        %v1659 = vpop.xlane.xlu0 %1658
        %v1660 = vsel %vm1431, %v1651, 0.0
        %1661 = vadd.xlane.f32.xlu0 %v1660
        %v1662 = vpop.xlane.xlu0 %1661
        %v1663 = vsel %vm1431, %v1653, 0.0
        %1664 = vadd.xlane.f32.xlu0 %v1663
        %v1665 = vpop.xlane.xlu0 %1664
        %v1666 = vrcp.pop %v1656
        %v1667 = vrcp.pop %v1659
        %v1668 = vrcp.pop %v1662
        %v1669 = vrcp.pop %v1665
        %v1670 = vmul.f32 %v1647, %v1666
        %v1671 = vmul.f32 %v1649, %v1667
        %v1672 = vmul.f32 %v1651, %v1668
        %v1673 = vmul.f32 %v1653, %v1669
        %v1674 = vpack.c.bf16 %v1670, %v1670
        %v1675 = vpack.c.bf16 %v1671, %v1671
        %v1676 = vpack.c.bf16 %v1672, %v1672
        %v1677 = vpack.c.bf16 %v1673, %v1673
        %v1678 = vpack.c.bf16 %v1262, %v1262
        %v1679 = vpack.c.bf16 %v1314, %v1314
        %v1680 = vpack.c.bf16 %v1366, %v1366
        %v1681 = vpack.c.bf16 %v1418, %v1418
        %v1683 = vsel %vm1431, %v1674, 0
        %vm1685 = vcmask 1043456
        %v1687 = vsel %vm1685, %v1678, 0
        %1689 = vmatprep.subr.bf16.mxu0 0
        %1690 = vmatpush1.bf16.msra.mxu0 %v1687
        %1691 = vmatprep.subr.bf16.mxu0 0
        %1692 = vmatpush1.bf16.msra.mxu0 0
        %1693 = vmatprep.subr.bf16.mxu0 0
        %1694 = vmatpush1.bf16.msra.mxu0 0
        %1695 = vmatprep.subr.bf16.mxu0 0
        %1696 = vmatpush1.bf16.msra.mxu0 0
        %1697 = vmatprep.subr.bf16.mxu0 0
        %1698 = vmatpush1.bf16.msra.mxu0 0
        %1699 = vmatprep.subr.bf16.mxu0 0
        %1700 = vmatpush1.bf16.msra.mxu0 0
        %1701 = vmatprep.subr.bf16.mxu0 0
        %1702 = vmatpush1.bf16.msra.mxu0 0
        %1703 = vmatprep.subr.bf16.mxu0 0
        %1704 = vmatpush1.bf16.msra.mxu0 0
        %1705 = vmatprep.subr.bf16.mxu0 0
        %1706 = vmatpush1.bf16.msra.mxu0 0
        %1707 = vmatprep.subr.bf16.mxu0 0
        %1708 = vmatpush1.bf16.msra.mxu0 0
        %1709 = vmatprep.subr.bf16.mxu0 0
        %1710 = vmatpush1.bf16.msra.mxu0 0
        %1711 = vmatprep.subr.bf16.mxu0 0
        %1712 = vmatpush1.bf16.msra.mxu0 0
        %1713 = vmatprep.subr.bf16.mxu0 0
        %1714 = vmatpush1.bf16.msra.mxu0 0
        %1715 = vmatprep.subr.bf16.mxu0 0
        %1716 = vmatpush1.bf16.msra.mxu0 0
        %1717 = vmatprep.subr.bf16.mxu0 0
        %1718 = vmatpush1.bf16.msra.mxu0 0
        %1719 = vmatprep.subr.bf16.mxu0 0
        %1720 = vmatpush1.bf16.msra.mxu0 0
        %1721 = vmatprep.mubr.bf16.mxu0 0
        %1722 = vmatmul.mubr.bf16.gmra.mrb[0].mxu0 %v1683
        %v1723 = vpop.f32.mrb[0].mxu0
        %v1724 = vadd.f32 0.0, %v1723
        %v1725 = vpop.f32.mrb[0].mxu0
        %v1726 = vpop.f32.mrb[0].mxu0
        %v1727 = vpop.f32.mrb[0].mxu0
        %1728 = vdwg.mxu0
        %v1730 = vsel %vm1431, %v1675, 0
        %v1733 = vsel %vm1685, %v1679, 0
        %1735 = vmatprep.subr.bf16.mxu0 0
        %1736 = vmatpush1.bf16.msra.mxu0 %v1733
        %1737 = vmatprep.subr.bf16.mxu0 0
        %1738 = vmatpush1.bf16.msra.mxu0 0
        %1739 = vmatprep.subr.bf16.mxu0 0
        %1740 = vmatpush1.bf16.msra.mxu0 0
        %1741 = vmatprep.subr.bf16.mxu0 0
        %1742 = vmatpush1.bf16.msra.mxu0 0
        %1743 = vmatprep.subr.bf16.mxu0 0
        %1744 = vmatpush1.bf16.msra.mxu0 0
        %1745 = vmatprep.subr.bf16.mxu0 0
        %1746 = vmatpush1.bf16.msra.mxu0 0
        %1747 = vmatprep.subr.bf16.mxu0 0
        %1748 = vmatpush1.bf16.msra.mxu0 0
        %1749 = vmatprep.subr.bf16.mxu0 0
        %1750 = vmatpush1.bf16.msra.mxu0 0
        %1751 = vmatprep.subr.bf16.mxu0 0
        %1752 = vmatpush1.bf16.msra.mxu0 0
        %1753 = vmatprep.subr.bf16.mxu0 0
        %1754 = vmatpush1.bf16.msra.mxu0 0
        %1755 = vmatprep.subr.bf16.mxu0 0
        %1756 = vmatpush1.bf16.msra.mxu0 0
        %1757 = vmatprep.subr.bf16.mxu0 0
        %1758 = vmatpush1.bf16.msra.mxu0 0
        %1759 = vmatprep.subr.bf16.mxu0 0
        %1760 = vmatpush1.bf16.msra.mxu0 0
        %1761 = vmatprep.subr.bf16.mxu0 0
        %1762 = vmatpush1.bf16.msra.mxu0 0
        %1763 = vmatprep.subr.bf16.mxu0 0
        %1764 = vmatpush1.bf16.msra.mxu0 0
        %1765 = vmatprep.subr.bf16.mxu0 0
        %1766 = vmatpush1.bf16.msra.mxu0 0
        %1767 = vmatprep.mubr.bf16.mxu0 0
        %1768 = vmatmul.mubr.bf16.gmra.mrb[0].mxu0 %v1730
        %v1769 = vpop.f32.mrb[0].mxu0
        %v1770 = vadd.f32 0.0, %v1769
        %v1771 = vpop.f32.mrb[0].mxu0
        %v1772 = vpop.f32.mrb[0].mxu0
        %v1773 = vpop.f32.mrb[0].mxu0
        %1774 = vdwg.mxu0
        %v1776 = vsel %vm1431, %v1676, 0
        %v1779 = vsel %vm1685, %v1680, 0
        %1781 = vmatprep.subr.bf16.mxu0 0
        %1782 = vmatpush1.bf16.msra.mxu0 %v1779
        %1783 = vmatprep.subr.bf16.mxu0 0
        %1784 = vmatpush1.bf16.msra.mxu0 0
        %1785 = vmatprep.subr.bf16.mxu0 0
        %1786 = vmatpush1.bf16.msra.mxu0 0
        %1787 = vmatprep.subr.bf16.mxu0 0
        %1788 = vmatpush1.bf16.msra.mxu0 0
        %1789 = vmatprep.subr.bf16.mxu0 0
        %1790 = vmatpush1.bf16.msra.mxu0 0
        %1791 = vmatprep.subr.bf16.mxu0 0
        %1792 = vmatpush1.bf16.msra.mxu0 0
        %1793 = vmatprep.subr.bf16.mxu0 0
        %1794 = vmatpush1.bf16.msra.mxu0 0
        %1795 = vmatprep.subr.bf16.mxu0 0
        %1796 = vmatpush1.bf16.msra.mxu0 0
        %1797 = vmatprep.subr.bf16.mxu0 0
        %1798 = vmatpush1.bf16.msra.mxu0 0
        %1799 = vmatprep.subr.bf16.mxu0 0
        %1800 = vmatpush1.bf16.msra.mxu0 0
        %1801 = vmatprep.subr.bf16.mxu0 0
        %1802 = vmatpush1.bf16.msra.mxu0 0
        %1803 = vmatprep.subr.bf16.mxu0 0
        %1804 = vmatpush1.bf16.msra.mxu0 0
        %1805 = vmatprep.subr.bf16.mxu0 0
        %1806 = vmatpush1.bf16.msra.mxu0 0
        %1807 = vmatprep.subr.bf16.mxu0 0
        %1808 = vmatpush1.bf16.msra.mxu0 0
        %1809 = vmatprep.subr.bf16.mxu0 0
        %1810 = vmatpush1.bf16.msra.mxu0 0
        %1811 = vmatprep.subr.bf16.mxu0 0
        %1812 = vmatpush1.bf16.msra.mxu0 0
        %1813 = vmatprep.mubr.bf16.mxu0 0
        %1814 = vmatmul.mubr.bf16.gmra.mrb[0].mxu0 %v1776
        %v1815 = vpop.f32.mrb[0].mxu0
        %v1816 = vadd.f32 0.0, %v1815
        %v1817 = vpop.f32.mrb[0].mxu0
        %v1818 = vpop.f32.mrb[0].mxu0
        %v1819 = vpop.f32.mrb[0].mxu0
        %1820 = vdwg.mxu0
        %v1822 = vsel %vm1431, %v1677, 0
        %v1825 = vsel %vm1685, %v1681, 0
        %1827 = vmatprep.subr.bf16.mxu0 0
        %1828 = vmatpush1.bf16.msra.mxu0 %v1825
        %1829 = vmatprep.subr.bf16.mxu0 0
        %1830 = vmatpush1.bf16.msra.mxu0 0
        %1831 = vmatprep.subr.bf16.mxu0 0
        %1832 = vmatpush1.bf16.msra.mxu0 0
        %1833 = vmatprep.subr.bf16.mxu0 0
        %1834 = vmatpush1.bf16.msra.mxu0 0
        %1835 = vmatprep.subr.bf16.mxu0 0
        %1836 = vmatpush1.bf16.msra.mxu0 0
        %1837 = vmatprep.subr.bf16.mxu0 0
        %1838 = vmatpush1.bf16.msra.mxu0 0
        %1839 = vmatprep.subr.bf16.mxu0 0
        %1840 = vmatpush1.bf16.msra.mxu0 0
        %1841 = vmatprep.subr.bf16.mxu0 0
        %1842 = vmatpush1.bf16.msra.mxu0 0
        %1843 = vmatprep.subr.bf16.mxu0 0
        %1844 = vmatpush1.bf16.msra.mxu0 0
        %1845 = vmatprep.subr.bf16.mxu0 0
        %1846 = vmatpush1.bf16.msra.mxu0 0
        %1847 = vmatprep.subr.bf16.mxu0 0
        %1848 = vmatpush1.bf16.msra.mxu0 0
        %1849 = vmatprep.subr.bf16.mxu0 0
        %1850 = vmatpush1.bf16.msra.mxu0 0
        %1851 = vmatprep.subr.bf16.mxu0 0
        %1852 = vmatpush1.bf16.msra.mxu0 0
        %1853 = vmatprep.subr.bf16.mxu0 0
        %1854 = vmatpush1.bf16.msra.mxu0 0
        %1855 = vmatprep.subr.bf16.mxu0 0
        %1856 = vmatpush1.bf16.msra.mxu0 0
        %1857 = vmatprep.subr.bf16.mxu0 0
        %1858 = vmatpush1.bf16.msra.mxu0 0
        %1859 = vmatprep.mubr.bf16.mxu0 0
        %1860 = vmatmul.mubr.bf16.gmra.mrb[0].mxu0 %v1822
        %v1861 = vpop.f32.mrb[0].mxu0
        %v1862 = vadd.f32 0.0, %v1861
        %v1863 = vpop.f32.mrb[0].mxu0
        %v1864 = vpop.f32.mrb[0].mxu0
        %v1865 = vpop.f32.mrb[0].mxu0
        %1866 = vdwg.mxu0
        %v1867 = vpack.c.bf16 %v1724, %v1724
        %v1868 = vpack.c.bf16 %v1770, %v1770
        %v1869 = vpack.c.bf16 %v1816, %v1816
        %v1870 = vpack.c.bf16 %v1862, %v1862
        %v1871 = vld [vmem:[%s9] sm:$0xf]
        %v1872 = vld [vmem:[%s9 + $0x4] sm:$0xf]
        %v1873 = vld [vmem:[%s9 + $0x8] sm:$0xf]
        %v1874 = vld [vmem:[%s9 + $0xc] sm:$0xf]
        %v1876 = vsel %vm1431, %v1867, 0
        %v1879 = vsel %vm1685, %v1871, 0
        %1881 = vmatprep.subr.bf16.mxu0 0
        %1882 = vmatpush1.bf16.msra.mxu0 %v1879
        %1883 = vmatprep.subr.bf16.mxu0 0
        %1884 = vmatpush1.bf16.msra.mxu0 0
        %1885 = vmatprep.subr.bf16.mxu0 0
        %1886 = vmatpush1.bf16.msra.mxu0 0
        %1887 = vmatprep.subr.bf16.mxu0 0
        %1888 = vmatpush1.bf16.msra.mxu0 0
        %1889 = vmatprep.subr.bf16.mxu0 0
        %1890 = vmatpush1.bf16.msra.mxu0 0
        %1891 = vmatprep.subr.bf16.mxu0 0
        %1892 = vmatpush1.bf16.msra.mxu0 0
        %1893 = vmatprep.subr.bf16.mxu0 0
        %1894 = vmatpush1.bf16.msra.mxu0 0
        %1895 = vmatprep.subr.bf16.mxu0 0
        %1896 = vmatpush1.bf16.msra.mxu0 0
        %1897 = vmatprep.subr.bf16.mxu0 0
        %1898 = vmatpush1.bf16.msra.mxu0 0
        %1899 = vmatprep.subr.bf16.mxu0 0
        %1900 = vmatpush1.bf16.msra.mxu0 0
        %1901 = vmatprep.subr.bf16.mxu0 0
        %1902 = vmatpush1.bf16.msra.mxu0 0
        %1903 = vmatprep.subr.bf16.mxu0 0
        %1904 = vmatpush1.bf16.msra.mxu0 0
        %1905 = vmatprep.subr.bf16.mxu0 0
        %1906 = vmatpush1.bf16.msra.mxu0 0
        %1907 = vmatprep.subr.bf16.mxu0 0
        %1908 = vmatpush1.bf16.msra.mxu0 0
        %1909 = vmatprep.subr.bf16.mxu0 0
        %1910 = vmatpush1.bf16.msra.mxu0 0
        %1911 = vmatprep.subr.bf16.mxu0 0
        %1912 = vmatpush1.bf16.msra.mxu0 0
        %1913 = vmatprep.mubr.bf16.mxu0 0
        %1914 = vmatmul.mubr.bf16.gmra.mrb[0].mxu0 %v1876
        %v1915 = vpop.f32.mrb[0].mxu0
        %v1916 = vadd.f32 0.0, %v1915
        %v1917 = vpop.f32.mrb[0].mxu0
        %v1918 = vpop.f32.mrb[0].mxu0
        %v1919 = vpop.f32.mrb[0].mxu0
        %1920 = vdwg.mxu0
        %v1922 = vsel %vm1431, %v1868, 0
        %v1925 = vsel %vm1685, %v1872, 0
        %1927 = vmatprep.subr.bf16.mxu0 0
        %1928 = vmatpush1.bf16.msra.mxu0 %v1925
        %1929 = vmatprep.subr.bf16.mxu0 0
        %1930 = vmatpush1.bf16.msra.mxu0 0
        %1931 = vmatprep.subr.bf16.mxu0 0
        %1932 = vmatpush1.bf16.msra.mxu0 0
        %1933 = vmatprep.subr.bf16.mxu0 0
        %1934 = vmatpush1.bf16.msra.mxu0 0
        %1935 = vmatprep.subr.bf16.mxu0 0
        %1936 = vmatpush1.bf16.msra.mxu0 0
        %1937 = vmatprep.subr.bf16.mxu0 0
        %1938 = vmatpush1.bf16.msra.mxu0 0
        %1939 = vmatprep.subr.bf16.mxu0 0
        %1940 = vmatpush1.bf16.msra.mxu0 0
        %1941 = vmatprep.subr.bf16.mxu0 0
        %1942 = vmatpush1.bf16.msra.mxu0 0
        %1943 = vmatprep.subr.bf16.mxu0 0
        %1944 = vmatpush1.bf16.msra.mxu0 0
        %1945 = vmatprep.subr.bf16.mxu0 0
        %1946 = vmatpush1.bf16.msra.mxu0 0
        %1947 = vmatprep.subr.bf16.mxu0 0
        %1948 = vmatpush1.bf16.msra.mxu0 0
        %1949 = vmatprep.subr.bf16.mxu0 0
        %1950 = vmatpush1.bf16.msra.mxu0 0
        %1951 = vmatprep.subr.bf16.mxu0 0
        %1952 = vmatpush1.bf16.msra.mxu0 0
        %1953 = vmatprep.subr.bf16.mxu0 0
        %1954 = vmatpush1.bf16.msra.mxu0 0
        %1955 = vmatprep.subr.bf16.mxu0 0
        %1956 = vmatpush1.bf16.msra.mxu0 0
        %1957 = vmatprep.subr.bf16.mxu0 0
        %1958 = vmatpush1.bf16.msra.mxu0 0
        %1959 = vmatprep.mubr.bf16.mxu0 0
        %1960 = vmatmul.mubr.bf16.gmra.mrb[0].mxu0 %v1922
        %v1961 = vpop.f32.mrb[0].mxu0
        %v1962 = vadd.f32 0.0, %v1961
        %v1963 = vpop.f32.mrb[0].mxu0
        %v1964 = vpop.f32.mrb[0].mxu0
        %v1965 = vpop.f32.mrb[0].mxu0
        %1966 = vdwg.mxu0
        %v1968 = vsel %vm1431, %v1869, 0
        %v1971 = vsel %vm1685, %v1873, 0
        %1973 = vmatprep.subr.bf16.mxu0 0
        %1974 = vmatpush1.bf16.msra.mxu0 %v1971
        %1975 = vmatprep.subr.bf16.mxu0 0
        %1976 = vmatpush1.bf16.msra.mxu0 0
        %1977 = vmatprep.subr.bf16.mxu0 0
        %1978 = vmatpush1.bf16.msra.mxu0 0
        %1979 = vmatprep.subr.bf16.mxu0 0
        %1980 = vmatpush1.bf16.msra.mxu0 0
        %1981 = vmatprep.subr.bf16.mxu0 0
        %1982 = vmatpush1.bf16.msra.mxu0 0
        %1983 = vmatprep.subr.bf16.mxu0 0
        %1984 = vmatpush1.bf16.msra.mxu0 0
        %1985 = vmatprep.subr.bf16.mxu0 0
        %1986 = vmatpush1.bf16.msra.mxu0 0
        %1987 = vmatprep.subr.bf16.mxu0 0
        %1988 = vmatpush1.bf16.msra.mxu0 0
        %1989 = vmatprep.subr.bf16.mxu0 0
        %1990 = vmatpush1.bf16.msra.mxu0 0
        %1991 = vmatprep.subr.bf16.mxu0 0
        %1992 = vmatpush1.bf16.msra.mxu0 0
        %1993 = vmatprep.subr.bf16.mxu0 0
        %1994 = vmatpush1.bf16.msra.mxu0 0
        %1995 = vmatprep.subr.bf16.mxu0 0
        %1996 = vmatpush1.bf16.msra.mxu0 0
        %1997 = vmatprep.subr.bf16.mxu0 0
        %1998 = vmatpush1.bf16.msra.mxu0 0
        %1999 = vmatprep.subr.bf16.mxu0 0
        %2000 = vmatpush1.bf16.msra.mxu0 0
        %2001 = vmatprep.subr.bf16.mxu0 0
        %2002 = vmatpush1.bf16.msra.mxu0 0
        %2003 = vmatprep.subr.bf16.mxu0 0
        %2004 = vmatpush1.bf16.msra.mxu0 0
        %2005 = vmatprep.mubr.bf16.mxu0 0
        %2006 = vmatmul.mubr.bf16.gmra.mrb[0].mxu0 %v1968
        %v2007 = vpop.f32.mrb[0].mxu0
        %v2008 = vadd.f32 0.0, %v2007
        %v2009 = vpop.f32.mrb[0].mxu0
        %v2010 = vpop.f32.mrb[0].mxu0
        %v2011 = vpop.f32.mrb[0].mxu0
        %2012 = vdwg.mxu0
        %v2014 = vsel %vm1431, %v1870, 0
        %v2017 = vsel %vm1685, %v1874, 0
        %2019 = vmatprep.subr.bf16.mxu0 0
        %2020 = vmatpush1.bf16.msra.mxu0 %v2017
        %2021 = vmatprep.subr.bf16.mxu0 0
        %2022 = vmatpush1.bf16.msra.mxu0 0
        %2023 = vmatprep.subr.bf16.mxu0 0
        %2024 = vmatpush1.bf16.msra.mxu0 0
        %2025 = vmatprep.subr.bf16.mxu0 0
        %2026 = vmatpush1.bf16.msra.mxu0 0
        %2027 = vmatprep.subr.bf16.mxu0 0
        %2028 = vmatpush1.bf16.msra.mxu0 0
        %2029 = vmatprep.subr.bf16.mxu0 0
        %2030 = vmatpush1.bf16.msra.mxu0 0
        %2031 = vmatprep.subr.bf16.mxu0 0
        %2032 = vmatpush1.bf16.msra.mxu0 0
        %2033 = vmatprep.subr.bf16.mxu0 0
        %2034 = vmatpush1.bf16.msra.mxu0 0
        %2035 = vmatprep.subr.bf16.mxu0 0
        %2036 = vmatpush1.bf16.msra.mxu0 0
        %2037 = vmatprep.subr.bf16.mxu0 0
        %2038 = vmatpush1.bf16.msra.mxu0 0
        %2039 = vmatprep.subr.bf16.mxu0 0
        %2040 = vmatpush1.bf16.msra.mxu0 0
        %2041 = vmatprep.subr.bf16.mxu0 0
        %2042 = vmatpush1.bf16.msra.mxu0 0
        %2043 = vmatprep.subr.bf16.mxu0 0
        %2044 = vmatpush1.bf16.msra.mxu0 0
        %2045 = vmatprep.subr.bf16.mxu0 0
        %2046 = vmatpush1.bf16.msra.mxu0 0
        %2047 = vmatprep.subr.bf16.mxu0 0
        %2048 = vmatpush1.bf16.msra.mxu0 0
        %2049 = vmatprep.subr.bf16.mxu0 0
        %2050 = vmatpush1.bf16.msra.mxu0 0
        %2051 = vmatprep.mubr.bf16.mxu0 0
        %2052 = vmatmul.mubr.bf16.gmra.mrb[0].mxu0 %v2014
        %v2053 = vpop.f32.mrb[0].mxu0
        %v2054 = vadd.f32 0.0, %v2053
        %v2055 = vpop.f32.mrb[0].mxu0
        %v2056 = vpop.f32.mrb[0].mxu0
        %v2057 = vpop.f32.mrb[0].mxu0
        %2058 = vdwg.mxu0
        %v2059 = vsel %vm716, %v1916, 0.0
        %v2060 = vsel %vm716, %v1962, 0.0
        %v2061 = vadd.f32 %v2059, %v2060
        %v2062 = vsel %vm716, %v2008, 0.0
        %v2063 = vadd.f32 %v2061, %v2062
        %v2064 = vsel %vm716, %v2054, 0.0
        %v2065 = vadd.f32 %v2063, %v2064
        %v2066 = vld [vmem:[%s10] sm:$0x1]
        %v2068 = vlaneseq
        %v2069 = vshrl.u32 %v2068, 7
        %v2070 = vsub.s32 0, %v2069
        %v2071 = vrot.slane %v2066, %v2070
        %v2073 = vadd.f32 %v2065, %v2071
        %v2074 = vadd.f32 %v2073, %v655
        %v2075 = vld [vmem:[%s11] sm:$0x1]
        %v2076 = vld [vmem:[%s12] sm:$0x1]
        %v2077 = vsel %vm716, %v2074, 0.0
        %2078 = vadd.xlane.f32.xlu0 %v2077
        %v2079 = vpop.xlane.xlu0 %2078
        %v2080 = vrcp.pop 32.0
        %v2081 = vmul.f32 %v2079, %v2080
        %v2082 = vsub.f32 %v2074, %v2081
        %v2083 = vmul.f32 %v2082, %v2082
        %v2084 = vsel %vm716, %v2083, 0.0
        %2085 = vadd.xlane.f32.xlu0 %v2084
        %v2086 = vpop.xlane.xlu0 %2085
        %v2087 = vmul.f32 %v2086, %v2080
        %v2088 = vadd.f32 %v2087, 1e-12
        %v2089 = vrsqrt.pop %v2088
        %v2090 = vmul.f32 %v2082, %v2089
        %v2092 = vlaneseq
        %v2093 = vshrl.u32 %v2092, 7
        %v2094 = vsub.s32 0, %v2093
        %v2095 = vrot.slane %v2075, %v2094
        %v2097 = vmul.f32 %v2095, %v2090
        %v2099 = vlaneseq
        %v2100 = vshrl.u32 %v2099, 7
        %v2101 = vsub.s32 0, %v2100
        %v2102 = vrot.slane %v2076, %v2101
        %v2104 = vadd.f32 %v2097, %v2102
        %v2105 = vpack.c.bf16 %v2104, %v2104
        %v2106 = vld [vmem:[%s13] sm:$0xf]
        %v2107 = vld [vmem:[%s13 + $0x4] sm:$0xf]
        %v2108 = vld [vmem:[%s13 + $0x8] sm:$0xf]
        %v2109 = vld [vmem:[%s13 + $0xc] sm:$0xf]
        %v2110 = vld [vmem:[%s14] sm:$0x1]
        %v2112 = vlaneseq
        %v2113 = vshrl.u32 %v2112, 7
        %v2114 = vsub.s32 0, %v2113
        %v2115 = vrot.slane %v2110, %v2114
        %v2121 = vunpack.c.l.b16 %v2106
        %v2122 = vunpack.c.l.b16 %v2107
        %v2123 = vunpack.c.l.b16 %v2108
        %v2124 = vunpack.c.l.b16 %v2109
        %v2125 = vpack.c.b16 %v2122, %v2121
        %v2126 = vpack.c.b16 %v2124, %v2123
        %v2130 = vsel %vm716, %v2105, 0
        %2132 = vmatprep.subr.bf16.mxu0 0
        %2133 = vmatpush1.bf16.msra.mxu0 %v2125
        %2134 = vmatprep.subr.bf16.mxu0 0
        %2135 = vmatpush1.bf16.msra.mxu0 %v2126
        %2136 = vmatprep.subr.bf16.mxu0 0
        %2137 = vmatpush1.bf16.msra.mxu0 0
        %2138 = vmatprep.subr.bf16.mxu0 0
        %2139 = vmatpush1.bf16.msra.mxu0 0
        %2140 = vmatprep.subr.bf16.mxu0 0
        %2141 = vmatpush1.bf16.msra.mxu0 0
        %2142 = vmatprep.subr.bf16.mxu0 0
        %2143 = vmatpush1.bf16.msra.mxu0 0
        %2144 = vmatprep.subr.bf16.mxu0 0
        %2145 = vmatpush1.bf16.msra.mxu0 0
        %2146 = vmatprep.subr.bf16.mxu0 0
        %2147 = vmatpush1.bf16.msra.mxu0 0
        %2148 = vmatprep.subr.bf16.mxu0 0
        %2149 = vmatpush1.bf16.msra.mxu0 0
        %2150 = vmatprep.subr.bf16.mxu0 0
        %2151 = vmatpush1.bf16.msra.mxu0 0
        %2152 = vmatprep.subr.bf16.mxu0 0
        %2153 = vmatpush1.bf16.msra.mxu0 0
        %2154 = vmatprep.subr.bf16.mxu0 0
        %2155 = vmatpush1.bf16.msra.mxu0 0
        %2156 = vmatprep.subr.bf16.mxu0 0
        %2157 = vmatpush1.bf16.msra.mxu0 0
        %2158 = vmatprep.subr.bf16.mxu0 0
        %2159 = vmatpush1.bf16.msra.mxu0 0
        %2160 = vmatprep.subr.bf16.mxu0 0
        %2161 = vmatpush1.bf16.msra.mxu0 0
        %2162 = vmatprep.subr.bf16.mxu0 0
        %2163 = vmatpush1.bf16.msra.mxu0 0
        %2164 = vmatprep.mubr.bf16.mxu0 0
        %2165 = vmatmul.mubr.bf16.gmra.mrb[0].mxu0 %v2130
        %v2166 = vpop.f32.mrb[0].mxu0
        %v2167 = vadd.f32 %v2115, %v2166
        %v2168 = vpop.f32.mrb[0].mxu0
        %v2169 = vpop.f32.mrb[0].mxu0
        %v2170 = vpop.f32.mrb[0].mxu0
        %2171 = vdwg.mxu0
        %v2172 = vmul.f32 %v2167, 0.5
        %v2173 = vrcp.pop 1.4142135
        %v2174 = vmul.f32 %v2167, %v2173
        %v2175 = verf.f32.pop %v2174
        %v2176 = vadd.f32 %v2175, 1.0
        %v2177 = vmul.f32 %v2172, %v2176
        %v2178 = vpack.c.bf16 %v2177, %v2177
        %v2179 = vld [vmem:[%s15] sm:$0xf]
        %v2180 = vld [vmem:[%s15 + $0x4] sm:$0xf]
        %v2181 = vld [vmem:[%s15 + $0x8] sm:$0xf]
        %v2182 = vld [vmem:[%s15 + $0xc] sm:$0xf]
        %v2183 = vld [vmem:[%s15 + $0x10] sm:$0xf]
        %v2184 = vld [vmem:[%s15 + $0x14] sm:$0xf]
        %v2185 = vld [vmem:[%s15 + $0x18] sm:$0xf]
        %v2186 = vld [vmem:[%s15 + $0x1c] sm:$0xf]
        %v2187 = vld [vmem:[%s15 + $0x20] sm:$0xf]
        %v2188 = vld [vmem:[%s15 + $0x24] sm:$0xf]
        %v2189 = vld [vmem:[%s15 + $0x28] sm:$0xf]
        %v2190 = vld [vmem:[%s15 + $0x2c] sm:$0xf]
        %v2191 = vld [vmem:[%s15 + $0x30] sm:$0xf]
        %v2192 = vld [vmem:[%s15 + $0x34] sm:$0xf]
        %v2193 = vld [vmem:[%s15 + $0x38] sm:$0xf]
        %v2194 = vld [vmem:[%s15 + $0x3c] sm:$0xf]
        %v2195 = vld [vmem:[%s16] sm:$0x1]
        %v2197 = vlaneseq
        %v2198 = vshrl.u32 %v2197, 7
        %v2199 = vsub.s32 0, %v2198
        %v2200 = vrot.slane %v2195, %v2199
        %v2218 = vunpack.c.l.b16 %v2179
        %v2219 = vunpack.c.l.b16 %v2180
        %v2220 = vunpack.c.l.b16 %v2181
        %v2221 = vunpack.c.l.b16 %v2182
        %v2222 = vunpack.c.l.b16 %v2183
        %v2223 = vunpack.c.l.b16 %v2184
        %v2224 = vunpack.c.l.b16 %v2185
        %v2225 = vunpack.c.l.b16 %v2186
        %v2226 = vunpack.c.l.b16 %v2187
        %v2227 = vunpack.c.l.b16 %v2188
        %v2228 = vunpack.c.l.b16 %v2189
        %v2229 = vunpack.c.l.b16 %v2190
        %v2230 = vunpack.c.l.b16 %v2191
        %v2231 = vunpack.c.l.b16 %v2192
        %v2232 = vunpack.c.l.b16 %v2193
        %v2233 = vunpack.c.l.b16 %v2194
        %v2234 = vpack.c.b16 %v2219, %v2218
        %v2235 = vpack.c.b16 %v2221, %v2220
        %v2236 = vpack.c.b16 %v2223, %v2222
        %v2237 = vpack.c.b16 %v2225, %v2224
        %v2238 = vpack.c.b16 %v2227, %v2226
        %v2239 = vpack.c.b16 %v2229, %v2228
        %v2240 = vpack.c.b16 %v2231, %v2230
        %v2241 = vpack.c.b16 %v2233, %v2232
        %2250 = vmatprep.subr.bf16.mxu0 0
        %2251 = vmatpush1.bf16.msra.mxu0 %v2234
        %2252 = vmatprep.subr.bf16.mxu0 0
        %2253 = vmatpush1.bf16.msra.mxu0 %v2235
        %2254 = vmatprep.subr.bf16.mxu0 0
        %2255 = vmatpush1.bf16.msra.mxu0 %v2236
        %2256 = vmatprep.subr.bf16.mxu0 0
        %2257 = vmatpush1.bf16.msra.mxu0 %v2237
        %2258 = vmatprep.subr.bf16.mxu0 0
        %2259 = vmatpush1.bf16.msra.mxu0 %v2238
        %2260 = vmatprep.subr.bf16.mxu0 0
        %2261 = vmatpush1.bf16.msra.mxu0 %v2239
        %2262 = vmatprep.subr.bf16.mxu0 0
        %2263 = vmatpush1.bf16.msra.mxu0 %v2240
        %2264 = vmatprep.subr.bf16.mxu0 0
        %2265 = vmatpush1.bf16.msra.mxu0 %v2241
        %2266 = vmatprep.subr.bf16.mxu0 0
        %2267 = vmatpush1.bf16.msra.mxu0 0
        %2268 = vmatprep.subr.bf16.mxu0 0
        %2269 = vmatpush1.bf16.msra.mxu0 0
        %2270 = vmatprep.subr.bf16.mxu0 0
        %2271 = vmatpush1.bf16.msra.mxu0 0
        %2272 = vmatprep.subr.bf16.mxu0 0
        %2273 = vmatpush1.bf16.msra.mxu0 0
        %2274 = vmatprep.subr.bf16.mxu0 0
        %2275 = vmatpush1.bf16.msra.mxu0 0
        %2276 = vmatprep.subr.bf16.mxu0 0
        %2277 = vmatpush1.bf16.msra.mxu0 0
        %2278 = vmatprep.subr.bf16.mxu0 0
        %2279 = vmatpush1.bf16.msra.mxu0 0
        %2280 = vmatprep.subr.bf16.mxu0 0
        %2281 = vmatpush1.bf16.msra.mxu0 0
        %2282 = vmatprep.mubr.bf16.mxu0 0
        %2283 = vmatmul.mubr.bf16.gmra.mrb[0].mxu0 %v2178
        %v2284 = vpop.f32.mrb[0].mxu0
        %v2285 = vadd.f32 %v2200, %v2284
        %v2286 = vpop.f32.mrb[0].mxu0
        %v2287 = vpop.f32.mrb[0].mxu0
        %v2288 = vpop.f32.mrb[0].mxu0
        %2289 = vdwg.mxu0
        %v2290 = vadd.f32 %v2285, %v2104
        %v2291 = vld [vmem:[%s17] sm:$0x1]
        %v2292 = vld [vmem:[%s18] sm:$0x1]
        %v2293 = vsel %vm716, %v2290, 0.0
        %2294 = vadd.xlane.f32.xlu0 %v2293
        %v2295 = vpop.xlane.xlu0 %2294
        %v2296 = vmul.f32 %v2295, %v2080
        %v2297 = vsub.f32 %v2290, %v2296
        %v2298 = vmul.f32 %v2297, %v2297
        %v2299 = vsel %vm716, %v2298, 0.0
        %2300 = vadd.xlane.f32.xlu0 %v2299
        %v2301 = vpop.xlane.xlu0 %2300
        %v2302 = vmul.f32 %v2301, %v2080
        %v2303 = vadd.f32 %v2302, 1e-12
        %v2304 = vrsqrt.pop %v2303
        %v2305 = vmul.f32 %v2297, %v2304
        %v2307 = vlaneseq
        %v2308 = vshrl.u32 %v2307, 7
        %v2309 = vsub.s32 0, %v2308
        %v2310 = vrot.slane %v2291, %v2309
        %v2312 = vmul.f32 %v2310, %v2305
        %v2314 = vlaneseq
        %v2315 = vshrl.u32 %v2314, 7
        %v2316 = vsub.s32 0, %v2315
        %v2317 = vrot.slane %v2292, %v2316
        %v2319 = vadd.f32 %v2312, %v2317
        %2320 = vst.msk [vmem:[%s639] sm:$0xff] %vm716, %v2319
        %s2321 = sand.u32 %s471, 1
        %s2322 = scalar_lea.sflag [#allocation3], %s2321
        %s2323 = sand.u32 %s471, 1
        %s2324 = smul.addr %s2323, 8
        %s2325 = scalar_lea.vmem [#allocation2], %s2324
        // Predicated region
        $region97: #{tpu_custom_call.1} parent=95 // pred_check
          %p2326 = pneg %p481
        $region98: #{tpu_custom_call.1} parent=95 // pred_check_branch
          %2328 = sbr.rel (%p2326) target = $region100
        $region99: #{tpu_custom_call.1} parent=95 // pred_region
          %s2330 = ssub.s32 128, 128
          %2331 = vsyncadd %s2322, %s2330
          %s2332 = sadd.s32 %s38, %s37
          %s2333 = smul.addr %s2332, 128
          %s2334 = scalar_lea.hbm %s19, %s2333
          %s2336 = sshll.u32 %s2325, 4
          %s2337 = int_to_ptr.vmem [resolvable:$true] %s2336
          %2339 = dma.vmem_to_hbm [thread:$0]  %s2337, 128, %s2334, %s2322
        $region100: #{tpu_custom_call.1} parent=95 // pred_fallthru
          _
      $region96: #{tpu_custom_call.1} parent=5 // pred_fallthru
        _
      %p2340 = scmp.le.s32.totalorder 2, %s28
      // Predicated region
      $region101: #{tpu_custom_call.1} parent=5 // pred_check
        %p2341 = pneg %p2340
      $region102: #{tpu_custom_call.1} parent=5 // pred_check_branch
        %2343 = sbr.rel (%p2341) target = $region104
      $region103: #{tpu_custom_call.1} parent=5 // pred_region
        %s2344 = ssub.s32 %s28, 2
        // Predicated region
        $region105: #{tpu_custom_call.1} parent=103 // pred_check
          %p2345 = pneg %p487
        $region106: #{tpu_custom_call.1} parent=103 // pred_check_branch
          %2347 = sbr.rel (%p2345) target = $region108
        $region107: #{tpu_custom_call.1} parent=103 // pred_region
          %s2348 = sand.u32 %s472, 1
          %s2349 = scalar_lea.sflag [#allocation3], %s2348
          %s2350 = sand.u32 %s472, 1
          %s2351 = smul.addr %s2350, 8
          %s2352 = scalar_lea.vmem [#allocation2], %s2351
          %2353 = dma.done %s2349, 128
        $region108: #{tpu_custom_call.1} parent=103 // pred_fallthru
          _
      $region104: #{tpu_custom_call.1} parent=5 // pred_fallthru
        _
    $region6: #{tpu_custom_call.1} parent=1 // loop_footer
      %s32 = sadd.s32 1, %s28
    $region7: #{tpu_custom_call.1} parent=1 // loop_footer_branch
      %27 = sbr.rel target = $region3
    $region8: #{tpu_custom_call.1} parent=1 // loop_exit
      _
    %2354 = vsyncpa [#allocation3], 1
    %s2355 = scalar_lea.sflag [#allocation3], 1
    %2356 = vsyncpa %s2355, 1

</llo_original>
